<compile_context>
chip_gen: v7x
topology: tpu7x:2x2x1
jax: 0.10.0
libtpu: 0.0.40
codegen_flags: <defaults>
</compile_context>

<pallas_src>
import functools

import jax
import jax.numpy as jnp
from jax import lax
from jax.experimental import pallas as pl
from jax.experimental.pallas import tpu as pltpu

BN_EPS = 1e-5

# Real (PyTorch) feature dims: input, 5 hidden, output.
REAL_DIMS = [32, 64, 128, 256, 128, 64, 16]


def _pad128(n):
    return ((n + 127) // 128) * 128


# Lane-padded dims used inside the kernel (input kept at 32; all layer outputs
# padded to a multiple of 128 lanes).
PAD_DIMS = [REAL_DIMS[0]] + [_pad128(d) for d in REAL_DIMS[1:]]
HIDDEN_PAD = PAD_DIMS[1:6]           # [128, 128, 256, 128, 128]
OUT_PAD = PAD_DIMS[6]                # 128
VEC_LEN = 2 * sum(HIDDEN_PAD) + OUT_PAD   # gamma/beta per hidden layer + b6


def mlp_kernel(x_ref, w1, w2, w3, w4, w5, w6, vec_ref, o_ref):
    B = x_ref.shape[0]
    inv_b = jnp.float32(1.0 / B)

    def matmul(h, w_ref):
        # MXU matmul; operands in the (possibly bf16) weight dtype, f32 accumulation.
        return jnp.dot(h.astype(w_ref.dtype), w_ref[...],
                       preferred_element_type=jnp.float32)

    def bn_sigmoid(z, g, be):
        # Training-mode BN.  Batch stats accumulate in exact f32 on the
        # VPU/XLU (sublane reduce) -- avoids the default-precision (bf16) MXU
        # truncation + cancellation issue flagged in review, and the MXU is
        # not the contended unit in this latency-bound kernel anyway.
        sum_z = jnp.sum(z, axis=0, keepdims=True)            # [1, N]
        sum_z2 = jnp.sum(z * z, axis=0, keepdims=True)       # [1, N]
        mean = sum_z * inv_b
        var = jnp.maximum(sum_z2 * inv_b - mean * mean, 0.0)  # biased; guard cancellation
        scale = lax.rsqrt(var + BN_EPS) * g                   # [1, N]
        shift = be - mean * scale                             # [1, N]
        y = z * scale + shift
        # sigmoid(y) == 0.5 * tanh(0.5 * y) + 0.5  (single EUP transcendental).
        return 0.5 * jnp.tanh(0.5 * y) + 0.5

    # x is consumed directly; the only cast on the critical path is the one
    # into the weight dtype inside matmul (no x -> f32 -> bf16 double cast).
    h = x_ref[...]
    off = 0
    # b1..b5 intentionally omitted: BN's mean subtraction cancels any
    # per-feature constant added before it (variance unchanged).
    for w_ref, n in zip((w1, w2, w3, w4, w5), HIDDEN_PAD):
        z = matmul(h, w_ref)
        g = vec_ref[:, off:off + n]            # static, 128-aligned slices
        be = vec_ref[:, off + n:off + 2 * n]
        off += 2 * n
        h = bn_sigmoid(z, g, be)
    # Final linear keeps its bias; the output is lane-padded to 128 so this is
    # a full unmasked store (real columns sliced back outside the kernel).
    o_ref[...] = (matmul(h, w6) + vec_ref[:, off:off + OUT_PAD]).astype(o_ref.dtype)


def init_params(key, input_size, output_size):
    """Deterministic synthetic parameters matching the PyTorch module's shapes."""
    dims = [input_size, 64, 128, 256, 128, 64, output_size]
    params = []
    for i in range(6):
        d_in, d_out = dims[i], dims[i + 1]
        key, kw, kb = jax.random.split(key, 3)
        scale = 1.0 / jnp.sqrt(jnp.float32(d_in))
        # Weights stored pre-transposed [in, out] so the hot path is a plain MXU dot.
        w = jax.random.uniform(kw, (d_in, d_out), jnp.float32, -scale, scale)
        b = jax.random.uniform(kb, (1, d_out), jnp.float32, -scale, scale)
        layer = {"w": w, "b": b}
        if i < 5:  # layers 1..5 have BatchNorm1d; PyTorch init: gamma=1, beta=0
            layer["gamma"] = jnp.ones((1, d_out), jnp.float32)
            layer["beta"] = jnp.zeros((1, d_out), jnp.float32)
        params.append(layer)
    return params


def pack_params(params, weight_dtype):
    """Pad weights to lane-dense (multiple-of-128) feature dims and pack all
    tiny vectors (gamma/beta per BN layer + final bias) into one f32 row.

    Padding is exact: padded weight columns/rows are zero and padded gamma/beta
    are zero, so padded activations (sigmoid(0)=0.5) hit zero weight rows in
    the next layer and contribute nothing.  b1..b5 are dropped (cancelled by
    training-mode BN).  Weights may be bf16 on any chip (v5e/v6e/v7x MXUs are
    all natively bf16); BN / elementwise math stays f32 in the kernel.
    """
    weights, vec_parts = [], []
    for i, layer in enumerate(params):
        d_in, d_out = layer["w"].shape
        p_in, p_out = PAD_DIMS[i], PAD_DIMS[i + 1]
        w = jnp.zeros((p_in, p_out), jnp.float32).at[:d_in, :d_out].set(layer["w"])
        weights.append(w.astype(weight_dtype))
        if i < 5:
            vec_parts.append(
                jnp.zeros((1, p_out), jnp.float32).at[:, :d_out].set(layer["gamma"]))
            vec_parts.append(
                jnp.zeros((1, p_out), jnp.float32).at[:, :d_out].set(layer["beta"]))
        else:
            vec_parts.append(
                jnp.zeros((1, p_out), jnp.float32).at[:, :d_out].set(layer["b"]))
    vec = jnp.concatenate(vec_parts, axis=-1)          # [1, VEC_LEN]
    assert vec.shape == (1, VEC_LEN), vec.shape
    return weights, vec


@functools.partial(jax.jit, static_argnames=("output_size",))
def mlp_forward(x, weights, vec, *, output_size):
    B = x.shape[0]   # prefer a multiple of 8 (sublanes); >=128 fills MXU rows

    w_bytes = sum(w.size * w.dtype.itemsize for w in weights)
    io_bytes = (x.size * x.dtype.itemsize + vec.size * vec.dtype.itemsize
                + B * OUT_PAD * 4)
    act_bytes = B * sum(PAD_DIMS[1:]) * 4          # live f32 activations (rough)
    # Scoped-VMEM request: enough for this batch (v5e default is only 16 MiB),
    # capped at 64 MiB so it never exceeds v7x physical VMEM.
    vmem_limit = int(min(64 * 1024 * 1024,
                         max(32 * 1024 * 1024,
                             2 * (w_bytes + io_bytes + act_bytes))))
    flops = 2 * B * sum(PAD_DIMS[i] * PAD_DIMS[i + 1] for i in range(6))

    vmem_spec = pl.BlockSpec(memory_space=pltpu.MemorySpace.VMEM)
    out_pad = pl.pallas_call(
        mlp_kernel,
        out_shape=jax.ShapeDtypeStruct((B, OUT_PAD), jnp.float32),
        in_specs=[vmem_spec] * (2 + len(weights)),   # x, w1..w6, packed vec
        out_specs=vmem_spec,
        compiler_params=pltpu.CompilerParams(vmem_limit_bytes=vmem_limit),
        cost_estimate=pl.CostEstimate(
            flops=flops,
            transcendentals=B * sum(HIDDEN_PAD),
            bytes_accessed=w_bytes + io_bytes),
    )(x, *weights, vec)
    return out_pad[:, :output_size]


def mlp_reference(x, params):
    """Pure-JAX f32 reference with the original module semantics
    (biases included, two-pass BN, exact sigmoid)."""
    h = x.astype(jnp.float32)
    for i, layer in enumerate(params):
        h = h @ layer["w"] + layer["b"]
        if i < 5:
            mean = jnp.mean(h, axis=0, keepdims=True)
            var = jnp.mean((h - mean) ** 2, axis=0, keepdims=True)
            h = (h - mean) * lax.rsqrt(var + BN_EPS)
            h = h * layer["gamma"] + layer["beta"]
            h = jax.nn.sigmoid(h)
    return h


if __name__ == "__main__":
    INPUT_SIZE = 32
    OUTPUT_SIZE = 16
    # Per review: feed a real batch -- multiple of 8 sublanes and >=128 so the
    # MXU rows are filled; still small enough for a quick demo run.
    BATCH = 128

    key = jax.random.PRNGKey(0)
    key, kx = jax.random.split(key)
    x = jax.random.normal(kx, (BATCH, INPUT_SIZE), jnp.float32)
    params = init_params(key, INPUT_SIZE, OUTPUT_SIZE)
    ref = mlp_reference(x, params)

    # f32-weight path: validates the kernel structure (bias-drop, one-pass BN
    # with exact-f32 stats, tanh-form sigmoid, lane padding).  Main matmuls run
    # at default MXU precision in both kernel and reference, so the tolerance
    # reflects bf16 operand rounding, not structural error.
    w_f32, vec_f32 = pack_params(params, jnp.float32)
    out_f32 = jax.block_until_ready(
        mlp_forward(x, w_f32, vec_f32, output_size=OUTPUT_SIZE))
    assert out_f32.shape == (BATCH, OUTPUT_SIZE), out_f32.shape
    assert jnp.allclose(out_f32, ref, atol=5e-3, rtol=5e-3), \
        "f32-weight path mismatch vs reference"

    # bf16-weight path (halves weight DMA/VMEM on v5e, v6e and v7x alike);
    # looser tolerance accounts for deliberate bf16 weight quantization.
    w_bf16, vec_bf16 = pack_params(params, jnp.bfloat16)
    out_bf16 = jax.block_until_ready(
        mlp_forward(x, w_bf16, vec_bf16, output_size=OUTPUT_SIZE))
    assert out_bf16.shape == (BATCH, OUTPUT_SIZE), out_bf16.shape
    assert jnp.allclose(out_bf16, ref, atol=5e-2, rtol=5e-2), \
        "bf16-weight path mismatch vs reference"

    print("KERNEL_OK")
</pallas_src>

<mosaic_0001>
module attributes {stable_mosaic.version = 11 : i64} {
  func.func @mlp_kernel(%arg0: memref<128x32xf32, #tpu.memory_space<vmem>>, %arg1: memref<32x128xf32, #tpu.memory_space<vmem>>, %arg2: memref<128x128xf32, #tpu.memory_space<vmem>>, %arg3: memref<128x256xf32, #tpu.memory_space<vmem>>, %arg4: memref<256x128xf32, #tpu.memory_space<vmem>>, %arg5: memref<128x128xf32, #tpu.memory_space<vmem>>, %arg6: memref<128x128xf32, #tpu.memory_space<vmem>>, %arg7: memref<1x1664xf32, #tpu.memory_space<vmem>>, %arg8: memref<128x128xf32, #tpu.memory_space<vmem>>) attributes {dimension_semantics = [], scalar_prefetch = 0 : i64, scratch_operands = 0 : i64, tpu.core_type = #tpu.core_type<tc>} {
    %c0 = arith.constant 0 : index
    %c0_0 = arith.constant 0 : index
    %0 = vector.load %arg0[%c0, %c0_0] : memref<128x32xf32, #tpu.memory_space<vmem>>, vector<128x32xf32>
    %c0_1 = arith.constant 0 : index
    %c0_2 = arith.constant 0 : index
    %1 = vector.load %arg1[%c0_1, %c0_2] : memref<32x128xf32, #tpu.memory_space<vmem>>, vector<32x128xf32>
    %cst = arith.constant dense<0.000000e+00> : vector<128x128xf32>
    %2 = tpu.matmul %0, %1, %cst {dimension_numbers = #tpu.dot_dimension_numbers<[1], [0], [0], [1], [0, 0, 1, 1], [], []>} : vector<128x32xf32>, vector<32x128xf32>, vector<128x128xf32> -> vector<128x128xf32>
    %c0_3 = arith.constant 0 : index
    %c0_4 = arith.constant 0 : index
    %3 = vector.load %arg7[%c0_3, %c0_4] : memref<1x1664xf32, #tpu.memory_space<vmem>>, vector<1x128xf32>
    %c0_5 = arith.constant 0 : index
    %c128 = arith.constant 128 : index
    %4 = vector.load %arg7[%c0_5, %c128] : memref<1x1664xf32, #tpu.memory_space<vmem>>, vector<1x128xf32>
    %cst_6 = arith.constant dense<0.000000e+00> : vector<128xf32>
    %5 = vector.multi_reduction <add>, %2, %cst_6 [0] : vector<128x128xf32> to vector<128xf32>
    %6 = vector.shape_cast %5 : vector<128xf32> to vector<1x128xf32>
    %7 = arith.mulf %2, %2 : vector<128x128xf32>
    %cst_7 = arith.constant dense<0.000000e+00> : vector<128xf32>
    %8 = vector.multi_reduction <add>, %7, %cst_7 [0] : vector<128x128xf32> to vector<128xf32>
    %9 = vector.shape_cast %8 : vector<128xf32> to vector<1x128xf32>
    %cst_8 = arith.constant 7.812500e-03 : f32
    %10 = vector.broadcast %cst_8 : f32 to vector<1x128xf32>
    %11 = arith.mulf %6, %10 : vector<1x128xf32>
    %cst_9 = arith.constant 7.812500e-03 : f32
    %12 = vector.broadcast %cst_9 : f32 to vector<1x128xf32>
    %13 = arith.mulf %9, %12 : vector<1x128xf32>
    %14 = arith.mulf %11, %11 : vector<1x128xf32>
    %15 = arith.subf %13, %14 : vector<1x128xf32>
    %cst_10 = arith.constant 0.000000e+00 : f32
    %16 = vector.broadcast %cst_10 : f32 to vector<1x128xf32>
    %17 = arith.maximumf %15, %16 : vector<1x128xf32>
    %cst_11 = arith.constant 9.99999974E-6 : f32
    %18 = vector.broadcast %cst_11 : f32 to vector<1x128xf32>
    %19 = arith.addf %17, %18 : vector<1x128xf32>
    %20 = math.rsqrt %19 : vector<1x128xf32>
    %21 = arith.mulf %20, %3 : vector<1x128xf32>
    %22 = arith.mulf %11, %21 : vector<1x128xf32>
    %23 = arith.subf %4, %22 : vector<1x128xf32>
    %24 = vector.broadcast %21 : vector<1x128xf32> to vector<128x128xf32>
    %25 = arith.mulf %2, %24 : vector<128x128xf32>
    %26 = vector.broadcast %23 : vector<1x128xf32> to vector<128x128xf32>
    %27 = arith.addf %25, %26 : vector<128x128xf32>
    %cst_12 = arith.constant 5.000000e-01 : f32
    %28 = vector.broadcast %cst_12 : f32 to vector<128x128xf32>
    %29 = arith.mulf %28, %27 : vector<128x128xf32>
    %30 = math.tanh %29 : vector<128x128xf32>
    %cst_13 = arith.constant 5.000000e-01 : f32
    %31 = vector.broadcast %cst_13 : f32 to vector<128x128xf32>
    %32 = arith.mulf %31, %30 : vector<128x128xf32>
    %cst_14 = arith.constant 5.000000e-01 : f32
    %33 = vector.broadcast %cst_14 : f32 to vector<128x128xf32>
    %34 = arith.addf %32, %33 : vector<128x128xf32>
    %c0_15 = arith.constant 0 : index
    %c0_16 = arith.constant 0 : index
    %35 = vector.load %arg2[%c0_15, %c0_16] : memref<128x128xf32, #tpu.memory_space<vmem>>, vector<128x128xf32>
    %cst_17 = arith.constant dense<0.000000e+00> : vector<128x128xf32>
    %36 = tpu.matmul %34, %35, %cst_17 {dimension_numbers = #tpu.dot_dimension_numbers<[1], [0], [0], [1], [0, 0, 1, 1], [], []>} : vector<128x128xf32>, vector<128x128xf32>, vector<128x128xf32> -> vector<128x128xf32>
    %c0_18 = arith.constant 0 : index
    %c256 = arith.constant 256 : index
    %37 = vector.load %arg7[%c0_18, %c256] : memref<1x1664xf32, #tpu.memory_space<vmem>>, vector<1x128xf32>
    %c0_19 = arith.constant 0 : index
    %c384 = arith.constant 384 : index
    %38 = vector.load %arg7[%c0_19, %c384] : memref<1x1664xf32, #tpu.memory_space<vmem>>, vector<1x128xf32>
    %cst_20 = arith.constant dense<0.000000e+00> : vector<128xf32>
    %39 = vector.multi_reduction <add>, %36, %cst_20 [0] : vector<128x128xf32> to vector<128xf32>
    %40 = vector.shape_cast %39 : vector<128xf32> to vector<1x128xf32>
    %41 = arith.mulf %36, %36 : vector<128x128xf32>
    %cst_21 = arith.constant dense<0.000000e+00> : vector<128xf32>
    %42 = vector.multi_reduction <add>, %41, %cst_21 [0] : vector<128x128xf32> to vector<128xf32>
    %43 = vector.shape_cast %42 : vector<128xf32> to vector<1x128xf32>
    %cst_22 = arith.constant 7.812500e-03 : f32
    %44 = vector.broadcast %cst_22 : f32 to vector<1x128xf32>
    %45 = arith.mulf %40, %44 : vector<1x128xf32>
    %cst_23 = arith.constant 7.812500e-03 : f32
    %46 = vector.broadcast %cst_23 : f32 to vector<1x128xf32>
    %47 = arith.mulf %43, %46 : vector<1x128xf32>
    %48 = arith.mulf %45, %45 : vector<1x128xf32>
    %49 = arith.subf %47, %48 : vector<1x128xf32>
    %cst_24 = arith.constant 0.000000e+00 : f32
    %50 = vector.broadcast %cst_24 : f32 to vector<1x128xf32>
    %51 = arith.maximumf %49, %50 : vector<1x128xf32>
    %cst_25 = arith.constant 9.99999974E-6 : f32
    %52 = vector.broadcast %cst_25 : f32 to vector<1x128xf32>
    %53 = arith.addf %51, %52 : vector<1x128xf32>
    %54 = math.rsqrt %53 : vector<1x128xf32>
    %55 = arith.mulf %54, %37 : vector<1x128xf32>
    %56 = arith.mulf %45, %55 : vector<1x128xf32>
    %57 = arith.subf %38, %56 : vector<1x128xf32>
    %58 = vector.broadcast %55 : vector<1x128xf32> to vector<128x128xf32>
    %59 = arith.mulf %36, %58 : vector<128x128xf32>
    %60 = vector.broadcast %57 : vector<1x128xf32> to vector<128x128xf32>
    %61 = arith.addf %59, %60 : vector<128x128xf32>
    %cst_26 = arith.constant 5.000000e-01 : f32
    %62 = vector.broadcast %cst_26 : f32 to vector<128x128xf32>
    %63 = arith.mulf %62, %61 : vector<128x128xf32>
    %64 = math.tanh %63 : vector<128x128xf32>
    %cst_27 = arith.constant 5.000000e-01 : f32
    %65 = vector.broadcast %cst_27 : f32 to vector<128x128xf32>
    %66 = arith.mulf %65, %64 : vector<128x128xf32>
    %cst_28 = arith.constant 5.000000e-01 : f32
    %67 = vector.broadcast %cst_28 : f32 to vector<128x128xf32>
    %68 = arith.addf %66, %67 : vector<128x128xf32>
    %c0_29 = arith.constant 0 : index
    %c0_30 = arith.constant 0 : index
    %69 = vector.load %arg3[%c0_29, %c0_30] : memref<128x256xf32, #tpu.memory_space<vmem>>, vector<128x256xf32>
    %cst_31 = arith.constant dense<0.000000e+00> : vector<128x256xf32>
    %70 = tpu.matmul %68, %69, %cst_31 {dimension_numbers = #tpu.dot_dimension_numbers<[1], [0], [0], [1], [0, 0, 1, 1], [], []>} : vector<128x128xf32>, vector<128x256xf32>, vector<128x256xf32> -> vector<128x256xf32>
    %c0_32 = arith.constant 0 : index
    %c512 = arith.constant 512 : index
    %71 = vector.load %arg7[%c0_32, %c512] : memref<1x1664xf32, #tpu.memory_space<vmem>>, vector<1x256xf32>
    %c0_33 = arith.constant 0 : index
    %c768 = arith.constant 768 : index
    %72 = vector.load %arg7[%c0_33, %c768] : memref<1x1664xf32, #tpu.memory_space<vmem>>, vector<1x256xf32>
    %cst_34 = arith.constant dense<0.000000e+00> : vector<256xf32>
    %73 = vector.multi_reduction <add>, %70, %cst_34 [0] : vector<128x256xf32> to vector<256xf32>
    %74 = vector.shape_cast %73 : vector<256xf32> to vector<1x256xf32>
    %75 = arith.mulf %70, %70 : vector<128x256xf32>
    %cst_35 = arith.constant dense<0.000000e+00> : vector<256xf32>
    %76 = vector.multi_reduction <add>, %75, %cst_35 [0] : vector<128x256xf32> to vector<256xf32>
    %77 = vector.shape_cast %76 : vector<256xf32> to vector<1x256xf32>
    %cst_36 = arith.constant 7.812500e-03 : f32
    %78 = vector.broadcast %cst_36 : f32 to vector<1x256xf32>
    %79 = arith.mulf %74, %78 : vector<1x256xf32>
    %cst_37 = arith.constant 7.812500e-03 : f32
    %80 = vector.broadcast %cst_37 : f32 to vector<1x256xf32>
    %81 = arith.mulf %77, %80 : vector<1x256xf32>
    %82 = arith.mulf %79, %79 : vector<1x256xf32>
    %83 = arith.subf %81, %82 : vector<1x256xf32>
    %cst_38 = arith.constant 0.000000e+00 : f32
    %84 = vector.broadcast %cst_38 : f32 to vector<1x256xf32>
    %85 = arith.maximumf %83, %84 : vector<1x256xf32>
    %cst_39 = arith.constant 9.99999974E-6 : f32
    %86 = vector.broadcast %cst_39 : f32 to vector<1x256xf32>
    %87 = arith.addf %85, %86 : vector<1x256xf32>
    %88 = math.rsqrt %87 : vector<1x256xf32>
    %89 = arith.mulf %88, %71 : vector<1x256xf32>
    %90 = arith.mulf %79, %89 : vector<1x256xf32>
    %91 = arith.subf %72, %90 : vector<1x256xf32>
    %92 = vector.broadcast %89 : vector<1x256xf32> to vector<128x256xf32>
    %93 = arith.mulf %70, %92 : vector<128x256xf32>
    %94 = vector.broadcast %91 : vector<1x256xf32> to vector<128x256xf32>
    %95 = arith.addf %93, %94 : vector<128x256xf32>
    %cst_40 = arith.constant 5.000000e-01 : f32
    %96 = vector.broadcast %cst_40 : f32 to vector<128x256xf32>
    %97 = arith.mulf %96, %95 : vector<128x256xf32>
    %98 = math.tanh %97 : vector<128x256xf32>
    %cst_41 = arith.constant 5.000000e-01 : f32
    %99 = vector.broadcast %cst_41 : f32 to vector<128x256xf32>
    %100 = arith.mulf %99, %98 : vector<128x256xf32>
    %cst_42 = arith.constant 5.000000e-01 : f32
    %101 = vector.broadcast %cst_42 : f32 to vector<128x256xf32>
    %102 = arith.addf %100, %101 : vector<128x256xf32>
    %c0_43 = arith.constant 0 : index
    %c0_44 = arith.constant 0 : index
    %103 = vector.load %arg4[%c0_43, %c0_44] : memref<256x128xf32, #tpu.memory_space<vmem>>, vector<256x128xf32>
    %cst_45 = arith.constant dense<0.000000e+00> : vector<128x128xf32>
    %104 = tpu.matmul %102, %103, %cst_45 {dimension_numbers = #tpu.dot_dimension_numbers<[1], [0], [0], [1], [0, 0, 1, 1], [], []>} : vector<128x256xf32>, vector<256x128xf32>, vector<128x128xf32> -> vector<128x128xf32>
    %c0_46 = arith.constant 0 : index
    %c1024 = arith.constant 1024 : index
    %105 = vector.load %arg7[%c0_46, %c1024] : memref<1x1664xf32, #tpu.memory_space<vmem>>, vector<1x128xf32>
    %c0_47 = arith.constant 0 : index
    %c1152 = arith.constant 1152 : index
    %106 = vector.load %arg7[%c0_47, %c1152] : memref<1x1664xf32, #tpu.memory_space<vmem>>, vector<1x128xf32>
    %cst_48 = arith.constant dense<0.000000e+00> : vector<128xf32>
    %107 = vector.multi_reduction <add>, %104, %cst_48 [0] : vector<128x128xf32> to vector<128xf32>
    %108 = vector.shape_cast %107 : vector<128xf32> to vector<1x128xf32>
    %109 = arith.mulf %104, %104 : vector<128x128xf32>
    %cst_49 = arith.constant dense<0.000000e+00> : vector<128xf32>
    %110 = vector.multi_reduction <add>, %109, %cst_49 [0] : vector<128x128xf32> to vector<128xf32>
    %111 = vector.shape_cast %110 : vector<128xf32> to vector<1x128xf32>
    %cst_50 = arith.constant 7.812500e-03 : f32
    %112 = vector.broadcast %cst_50 : f32 to vector<1x128xf32>
    %113 = arith.mulf %108, %112 : vector<1x128xf32>
    %cst_51 = arith.constant 7.812500e-03 : f32
    %114 = vector.broadcast %cst_51 : f32 to vector<1x128xf32>
    %115 = arith.mulf %111, %114 : vector<1x128xf32>
    %116 = arith.mulf %113, %113 : vector<1x128xf32>
    %117 = arith.subf %115, %116 : vector<1x128xf32>
    %cst_52 = arith.constant 0.000000e+00 : f32
    %118 = vector.broadcast %cst_52 : f32 to vector<1x128xf32>
    %119 = arith.maximumf %117, %118 : vector<1x128xf32>
    %cst_53 = arith.constant 9.99999974E-6 : f32
    %120 = vector.broadcast %cst_53 : f32 to vector<1x128xf32>
    %121 = arith.addf %119, %120 : vector<1x128xf32>
    %122 = math.rsqrt %121 : vector<1x128xf32>
    %123 = arith.mulf %122, %105 : vector<1x128xf32>
    %124 = arith.mulf %113, %123 : vector<1x128xf32>
    %125 = arith.subf %106, %124 : vector<1x128xf32>
    %126 = vector.broadcast %123 : vector<1x128xf32> to vector<128x128xf32>
    %127 = arith.mulf %104, %126 : vector<128x128xf32>
    %128 = vector.broadcast %125 : vector<1x128xf32> to vector<128x128xf32>
    %129 = arith.addf %127, %128 : vector<128x128xf32>
    %cst_54 = arith.constant 5.000000e-01 : f32
    %130 = vector.broadcast %cst_54 : f32 to vector<128x128xf32>
    %131 = arith.mulf %130, %129 : vector<128x128xf32>
    %132 = math.tanh %131 : vector<128x128xf32>
    %cst_55 = arith.constant 5.000000e-01 : f32
    %133 = vector.broadcast %cst_55 : f32 to vector<128x128xf32>
    %134 = arith.mulf %133, %132 : vector<128x128xf32>
    %cst_56 = arith.constant 5.000000e-01 : f32
    %135 = vector.broadcast %cst_56 : f32 to vector<128x128xf32>
    %136 = arith.addf %134, %135 : vector<128x128xf32>
    %c0_57 = arith.constant 0 : index
    %c0_58 = arith.constant 0 : index
    %137 = vector.load %arg5[%c0_57, %c0_58] : memref<128x128xf32, #tpu.memory_space<vmem>>, vector<128x128xf32>
    %cst_59 = arith.constant dense<0.000000e+00> : vector<128x128xf32>
    %138 = tpu.matmul %136, %137, %cst_59 {dimension_numbers = #tpu.dot_dimension_numbers<[1], [0], [0], [1], [0, 0, 1, 1], [], []>} : vector<128x128xf32>, vector<128x128xf32>, vector<128x128xf32> -> vector<128x128xf32>
    %c0_60 = arith.constant 0 : index
    %c1280 = arith.constant 1280 : index
    %139 = vector.load %arg7[%c0_60, %c1280] : memref<1x1664xf32, #tpu.memory_space<vmem>>, vector<1x128xf32>
    %c0_61 = arith.constant 0 : index
    %c1408 = arith.constant 1408 : index
    %140 = vector.load %arg7[%c0_61, %c1408] : memref<1x1664xf32, #tpu.memory_space<vmem>>, vector<1x128xf32>
    %cst_62 = arith.constant dense<0.000000e+00> : vector<128xf32>
    %141 = vector.multi_reduction <add>, %138, %cst_62 [0] : vector<128x128xf32> to vector<128xf32>
    %142 = vector.shape_cast %141 : vector<128xf32> to vector<1x128xf32>
    %143 = arith.mulf %138, %138 : vector<128x128xf32>
    %cst_63 = arith.constant dense<0.000000e+00> : vector<128xf32>
    %144 = vector.multi_reduction <add>, %143, %cst_63 [0] : vector<128x128xf32> to vector<128xf32>
    %145 = vector.shape_cast %144 : vector<128xf32> to vector<1x128xf32>
    %cst_64 = arith.constant 7.812500e-03 : f32
    %146 = vector.broadcast %cst_64 : f32 to vector<1x128xf32>
    %147 = arith.mulf %142, %146 : vector<1x128xf32>
    %cst_65 = arith.constant 7.812500e-03 : f32
    %148 = vector.broadcast %cst_65 : f32 to vector<1x128xf32>
    %149 = arith.mulf %145, %148 : vector<1x128xf32>
    %150 = arith.mulf %147, %147 : vector<1x128xf32>
    %151 = arith.subf %149, %150 : vector<1x128xf32>
    %cst_66 = arith.constant 0.000000e+00 : f32
    %152 = vector.broadcast %cst_66 : f32 to vector<1x128xf32>
    %153 = arith.maximumf %151, %152 : vector<1x128xf32>
    %cst_67 = arith.constant 9.99999974E-6 : f32
    %154 = vector.broadcast %cst_67 : f32 to vector<1x128xf32>
    %155 = arith.addf %153, %154 : vector<1x128xf32>
    %156 = math.rsqrt %155 : vector<1x128xf32>
    %157 = arith.mulf %156, %139 : vector<1x128xf32>
    %158 = arith.mulf %147, %157 : vector<1x128xf32>
    %159 = arith.subf %140, %158 : vector<1x128xf32>
    %160 = vector.broadcast %157 : vector<1x128xf32> to vector<128x128xf32>
    %161 = arith.mulf %138, %160 : vector<128x128xf32>
    %162 = vector.broadcast %159 : vector<1x128xf32> to vector<128x128xf32>
    %163 = arith.addf %161, %162 : vector<128x128xf32>
    %cst_68 = arith.constant 5.000000e-01 : f32
    %164 = vector.broadcast %cst_68 : f32 to vector<128x128xf32>
    %165 = arith.mulf %164, %163 : vector<128x128xf32>
    %166 = math.tanh %165 : vector<128x128xf32>
    %cst_69 = arith.constant 5.000000e-01 : f32
    %167 = vector.broadcast %cst_69 : f32 to vector<128x128xf32>
    %168 = arith.mulf %167, %166 : vector<128x128xf32>
    %cst_70 = arith.constant 5.000000e-01 : f32
    %169 = vector.broadcast %cst_70 : f32 to vector<128x128xf32>
    %170 = arith.addf %168, %169 : vector<128x128xf32>
    %c0_71 = arith.constant 0 : index
    %c0_72 = arith.constant 0 : index
    %171 = vector.load %arg6[%c0_71, %c0_72] : memref<128x128xf32, #tpu.memory_space<vmem>>, vector<128x128xf32>
    %cst_73 = arith.constant dense<0.000000e+00> : vector<128x128xf32>
    %172 = tpu.matmul %170, %171, %cst_73 {dimension_numbers = #tpu.dot_dimension_numbers<[1], [0], [0], [1], [0, 0, 1, 1], [], []>} : vector<128x128xf32>, vector<128x128xf32>, vector<128x128xf32> -> vector<128x128xf32>
    %c0_74 = arith.constant 0 : index
    %c1536 = arith.constant 1536 : index
    %173 = vector.load %arg7[%c0_74, %c1536] : memref<1x1664xf32, #tpu.memory_space<vmem>>, vector<1x128xf32>
    %174 = vector.broadcast %173 : vector<1x128xf32> to vector<128x128xf32>
    %175 = arith.addf %172, %174 : vector<128x128xf32>
    %c0_75 = arith.constant 0 : index
    %c0_76 = arith.constant 0 : index
    %176 = vector.load %arg8[%c0_75, %c0_76] : memref<128x128xf32, #tpu.memory_space<vmem>>, vector<128x128xf32>
    tpu.vector_store %arg8[%c0_75, %c0_76], %175 {strides = array<i32>} : memref<128x128xf32, #tpu.memory_space<vmem>>, vector<128x128xf32>,
    return
  }
}

</mosaic_0001>

<llo_original>
// kernel: mlp_forward.1
$region0: #{mlp_forward.1}
  #allocation0 [shape = 'u32[]', space=smem, size = 0x4, offset = 0x4, fixed_abs, tag = 'smem constant byte address 0x4 - core index']
  #allocation1 [shape = 'u32[144,128]{1,0:T(1,128)}', space=vmem, size = 0x12000, scoped, tag = 'internal scratch']
  %s0 = inlined_call_operand.vmem [shape: f32[128,32], index: 0, kind: input, shape index: {}]
  %s1 = inlined_call_operand.vmem [shape: f32[32,128], index: 1, kind: input, shape index: {}]
  %s2 = inlined_call_operand.vmem [shape: f32[128,128], index: 2, kind: input, shape index: {}]
  %s3 = inlined_call_operand.hbm [shape: f32[128,256], index: 3, kind: input, shape index: {}]
  %s4 = inlined_call_operand.hbm [shape: f32[256,128], index: 4, kind: input, shape index: {}]
  %s5 = inlined_call_operand.hbm [shape: f32[128,128], index: 5, kind: input, shape index: {}]
  %s6 = inlined_call_operand.hbm [shape: f32[128,128], index: 6, kind: input, shape index: {}]
  %s7 = inlined_call_operand.vmem [shape: f32[1,1664], index: 7, kind: input, shape index: {}]
  %s8 = inlined_call_operand.vmem [shape: f32[128,128], index: 8, kind: output, shape index: {}]
  %s9 = sld [smem:[#allocation0]]
  $region58: #{mlp_forward.1} parent=0
    _
  %s11 = ssub.s32 1, %s9
  %s12 = scalar_select 0, %s11, %s9
  $region1: #{mlp_forward.1} parent=0
    #allocation2 [shape = 'u8[131072]{0}', space=vmem, size = 0x20000, scoped, tag = 'input window, operand 3, single buffered']
    #allocation3 [shape = 's32[1]{0}', space=sflag, size = 0x4, scoped, tag = 'scoped memory for mlp_forward.1']
    #allocation4 [shape = 'u8[131072]{0}', space=vmem, size = 0x20000, scoped, tag = 'input window, operand 4, single buffered']
    #allocation5 [shape = 's32[1]{0}', space=sflag, size = 0x4, scoped, tag = 'scoped memory for mlp_forward.1']
    #allocation6 [shape = 'u8[65536]{0}', space=vmem, size = 0x10000, scoped, tag = 'input window, operand 5, single buffered']
    #allocation7 [shape = 'u8[65536]{0}', space=vmem, size = 0x10000, scoped, tag = 'input window, operand 6, single buffered']
    #allocation8 [shape = 's32[1]{0}', space=sflag, size = 0x4, scoped, tag = 'scoped memory for mlp_forward.1']
    %13 = vsyncpa [#allocation3], 0
    %14 = vsyncpa [#allocation5], 0
    %15 = vsyncpa [#allocation8], 0
    // Predicated region
    $region2: #{mlp_forward.1} parent=1 // pred_check
      _
    $region3: #{mlp_forward.1} parent=1 // pred_check_branch
      %17 = sbr.rel (0) target = $region5
    $region4: #{mlp_forward.1} parent=1 // pred_region
      _
    $region5: #{mlp_forward.1} parent=1 // pred_fallthru
      _
    // Predicated region
    $region6: #{mlp_forward.1} parent=1 // pred_check
      _
    $region7: #{mlp_forward.1} parent=1 // pred_check_branch
      %19 = sbr.rel (0) target = $region9
    $region8: #{mlp_forward.1} parent=1 // pred_region
      _
    $region9: #{mlp_forward.1} parent=1 // pred_fallthru
      _
    // Predicated region
    $region10: #{mlp_forward.1} parent=1 // pred_check
      _
    $region11: #{mlp_forward.1} parent=1 // pred_check_branch
      %21 = sbr.rel (0) target = $region13
    $region12: #{mlp_forward.1} parent=1 // pred_region
      _
    $region13: #{mlp_forward.1} parent=1 // pred_fallthru
      _
    // Predicated region
    $region14: #{mlp_forward.1} parent=1 // pred_check
      _
    $region15: #{mlp_forward.1} parent=1 // pred_check_branch
      %23 = sbr.rel (0) target = $region17
    $region16: #{mlp_forward.1} parent=1 // pred_region
      %s25 = ssub.s32 4096, 4096
      %26 = vsyncadd [#allocation3], %s25
      %s27 = sshll.u32 [#allocation2], 4
      %s28 = int_to_ptr.vmem [resolvable:$true] %s27
      %33 = dma.hbm_to_vmem [thread:$0]  %s3, 4096, %s28, [#allocation3], 256, 256, 16
    $region17: #{mlp_forward.1} parent=1 // pred_fallthru
      _
    // Predicated region
    $region18: #{mlp_forward.1} parent=1 // pred_check
      _
    $region19: #{mlp_forward.1} parent=1 // pred_check_branch
      %35 = sbr.rel (0) target = $region21
    $region20: #{mlp_forward.1} parent=1 // pred_region
      %s37 = ssub.s32 4096, 4096
      %38 = vsyncadd [#allocation5], %s37
      %s39 = sshll.u32 [#allocation4], 4
      %s40 = int_to_ptr.vmem [resolvable:$true] %s39
      %45 = dma.hbm_to_vmem [thread:$0]  %s4, 4096, %s40, [#allocation5], 128, 128, 8
    $region21: #{mlp_forward.1} parent=1 // pred_fallthru
      _
    // Predicated region
    $region22: #{mlp_forward.1} parent=1 // pred_check
      _
    $region23: #{mlp_forward.1} parent=1 // pred_check_branch
      %47 = sbr.rel (0) target = $region25
    $region24: #{mlp_forward.1} parent=1 // pred_region
      %s49 = ssub.s32 2048, 2048
      %50 = vsyncadd [#allocation5], %s49
      %s51 = sshll.u32 [#allocation6], 4
      %s52 = int_to_ptr.vmem [resolvable:$true] %s51
      %57 = dma.hbm_to_vmem [thread:$0]  %s5, 2048, %s52, [#allocation5], 128, 128, 8
    $region25: #{mlp_forward.1} parent=1 // pred_fallthru
      _
    // Predicated region
    $region26: #{mlp_forward.1} parent=1 // pred_check
      _
    $region27: #{mlp_forward.1} parent=1 // pred_check_branch
      %59 = sbr.rel (0) target = $region29
    $region28: #{mlp_forward.1} parent=1 // pred_region
      %s61 = ssub.s32 2048, 2048
      %62 = vsyncadd [#allocation8], %s61
      %s63 = sshll.u32 [#allocation7], 4
      %s64 = int_to_ptr.vmem [resolvable:$true] %s63
      %69 = dma.hbm_to_vmem [thread:$0]  %s6, 2048, %s64, [#allocation8], 128, 128, 8
    $region29: #{mlp_forward.1} parent=1 // pred_fallthru
      _
    // Predicated region
    $region30: #{mlp_forward.1} parent=1 // pred_check
      _
    $region31: #{mlp_forward.1} parent=1 // pred_check_branch
      %71 = sbr.rel (0) target = $region33
    $region32: #{mlp_forward.1} parent=1 // pred_region
      _
    $region33: #{mlp_forward.1} parent=1 // pred_fallthru
      _
    // Predicated region
    $region34: #{mlp_forward.1} parent=1 // pred_check
      _
    $region35: #{mlp_forward.1} parent=1 // pred_check_branch
      %73 = sbr.rel (0) target = $region37
    $region36: #{mlp_forward.1} parent=1 // pred_region
      %74 = dma.done [#allocation3], 4096
    $region37: #{mlp_forward.1} parent=1 // pred_fallthru
      _
    // Predicated region
    $region38: #{mlp_forward.1} parent=1 // pred_check
      _
    $region39: #{mlp_forward.1} parent=1 // pred_check_branch
      %76 = sbr.rel (0) target = $region41
    $region40: #{mlp_forward.1} parent=1 // pred_region
      %77 = dma.done [#allocation5], 4096
    $region41: #{mlp_forward.1} parent=1 // pred_fallthru
      _
    // Predicated region
    $region42: #{mlp_forward.1} parent=1 // pred_check
      _
    $region43: #{mlp_forward.1} parent=1 // pred_check_branch
      %79 = sbr.rel (0) target = $region45
    $region44: #{mlp_forward.1} parent=1 // pred_region
      %80 = dma.done [#allocation5], 2048
    $region45: #{mlp_forward.1} parent=1 // pred_fallthru
      _
    // Predicated region
    $region46: #{mlp_forward.1} parent=1 // pred_check
      _
    $region47: #{mlp_forward.1} parent=1 // pred_check_branch
      %82 = sbr.rel (0) target = $region49
    $region48: #{mlp_forward.1} parent=1 // pred_region
      %83 = dma.done [#allocation8], 2048
    $region49: #{mlp_forward.1} parent=1 // pred_fallthru
      _
    %v84 = vld [vmem:[%s0] sm:$0xff]
    %v85 = vld [vmem:[%s0 + $0x8] sm:$0xff]
    %v86 = vld [vmem:[%s0 + $0x10] sm:$0xff]
    %v87 = vld [vmem:[%s0 + $0x18] sm:$0xff]
    %v88 = vld [vmem:[%s0 + $0x20] sm:$0xff]
    %v89 = vld [vmem:[%s0 + $0x28] sm:$0xff]
    %v90 = vld [vmem:[%s0 + $0x30] sm:$0xff]
    %v91 = vld [vmem:[%s0 + $0x38] sm:$0xff]
    %v92 = vld [vmem:[%s0 + $0x40] sm:$0xff]
    %v93 = vld [vmem:[%s0 + $0x48] sm:$0xff]
    %v94 = vld [vmem:[%s0 + $0x50] sm:$0xff]
    %v95 = vld [vmem:[%s0 + $0x58] sm:$0xff]
    %v96 = vld [vmem:[%s0 + $0x60] sm:$0xff]
    %v97 = vld [vmem:[%s0 + $0x68] sm:$0xff]
    %v98 = vld [vmem:[%s0 + $0x70] sm:$0xff]
    %v99 = vld [vmem:[%s0 + $0x78] sm:$0xff]
    %v100 = vld [vmem:[%s1] sm:$0xff]
    %v101 = vld [vmem:[%s1 + $0x8] sm:$0xff]
    %v102 = vld [vmem:[%s1 + $0x10] sm:$0xff]
    %v103 = vld [vmem:[%s1 + $0x18] sm:$0xff]
    %vm104 = vcmask 261120
    %v106 = vsel %vm104, %v84, 0
    %v109 = vsel %vm104, %v85, 0
    %v112 = vsel %vm104, %v86, 0
    %v115 = vsel %vm104, %v87, 0
    %v118 = vsel %vm104, %v88, 0
    %v121 = vsel %vm104, %v89, 0
    %v124 = vsel %vm104, %v90, 0
    %v127 = vsel %vm104, %v91, 0
    %v130 = vsel %vm104, %v92, 0
    %v133 = vsel %vm104, %v93, 0
    %v136 = vsel %vm104, %v94, 0
    %v139 = vsel %vm104, %v95, 0
    %v142 = vsel %vm104, %v96, 0
    %v145 = vsel %vm104, %v97, 0
    %v148 = vsel %vm104, %v98, 0
    %v151 = vsel %vm104, %v99, 0
    %153 = vmatprep.subr.mxu0 0.0
    %154 = vmatpush1.msra.mxu0 %v100
    %155 = vmatprep.subr.mxu0 0.0
    %156 = vmatpush1.msra.mxu0 %v101
    %157 = vmatprep.subr.mxu0 0.0
    %158 = vmatpush1.msra.mxu0 %v102
    %159 = vmatprep.subr.mxu0 0.0
    %160 = vmatpush1.msra.mxu0 %v103
    %161 = vmatprep.subr.mxu0 0.0
    %162 = vmatpush1.msra.mxu0 0.0
    %163 = vmatprep.subr.mxu0 0.0
    %164 = vmatpush1.msra.mxu0 0.0
    %165 = vmatprep.subr.mxu0 0.0
    %166 = vmatpush1.msra.mxu0 0.0
    %167 = vmatprep.subr.mxu0 0.0
    %168 = vmatpush1.msra.mxu0 0.0
    %169 = vmatprep.subr.mxu0 0.0
    %170 = vmatpush1.msra.mxu0 0.0
    %171 = vmatprep.subr.mxu0 0.0
    %172 = vmatpush1.msra.mxu0 0.0
    %173 = vmatprep.subr.mxu0 0.0
    %174 = vmatpush1.msra.mxu0 0.0
    %175 = vmatprep.subr.mxu0 0.0
    %176 = vmatpush1.msra.mxu0 0.0
    %177 = vmatprep.subr.mxu0 0.0
    %178 = vmatpush1.msra.mxu0 0.0
    %179 = vmatprep.subr.mxu0 0.0
    %180 = vmatpush1.msra.mxu0 0.0
    %181 = vmatprep.subr.mxu0 0.0
    %182 = vmatpush1.msra.mxu0 0.0
    %183 = vmatprep.subr.mxu0 0.0
    %184 = vmatpush1.msra.mxu0 0.0
    %185 = vmatprep.subr.mxu0 0.0
    %186 = vmatpush1.msra.mxu0 0.0
    %187 = vmatprep.subr.mxu0 0.0
    %188 = vmatpush1.msra.mxu0 0.0
    %189 = vmatprep.subr.mxu0 0.0
    %190 = vmatpush1.msra.mxu0 0.0
    %191 = vmatprep.subr.mxu0 0.0
    %192 = vmatpush1.msra.mxu0 0.0
    %193 = vmatprep.subr.mxu0 0.0
    %194 = vmatpush1.msra.mxu0 0.0
    %195 = vmatprep.subr.mxu0 0.0
    %196 = vmatpush1.msra.mxu0 0.0
    %197 = vmatprep.subr.mxu0 0.0
    %198 = vmatpush1.msra.mxu0 0.0
    %199 = vmatprep.subr.mxu0 0.0
    %200 = vmatpush1.msra.mxu0 0.0
    %201 = vmatprep.subr.mxu0 0.0
    %202 = vmatpush1.msra.mxu0 0.0
    %203 = vmatprep.subr.mxu0 0.0
    %204 = vmatpush1.msra.mxu0 0.0
    %205 = vmatprep.subr.mxu0 0.0
    %206 = vmatpush1.msra.mxu0 0.0
    %207 = vmatprep.subr.mxu0 0.0
    %208 = vmatpush1.msra.mxu0 0.0
    %209 = vmatprep.subr.mxu0 0.0
    %210 = vmatpush1.msra.mxu0 0.0
    %211 = vmatprep.subr.mxu0 0.0
    %212 = vmatpush1.msra.mxu0 0.0
    %213 = vmatprep.subr.mxu0 0.0
    %214 = vmatpush1.msra.mxu0 0.0
    %215 = vmatprep.subr.mxu0 0.0
    %216 = vmatpush1.msra.mxu0 0.0
    %217 = vmatprep.mubr.f32.mxu0 0.0
    %218 = vmatmul.mubr.f32.gmra.mrb[0].mxu0 %v106
    %v219 = vpop.f32.mrb[0].mxu0
    %v220 = vadd.f32 0.0, %v219
    %v221 = vpop.f32.mrb[0].mxu0
    %222 = vmatprep.mubr.f32.mxu0 0.0
    %223 = vmatmul.mubr.f32.gmra.mrb[0].mxu0 %v109
    %v224 = vpop.f32.mrb[0].mxu0
    %v225 = vadd.f32 0.0, %v224
    %v226 = vpop.f32.mrb[0].mxu0
    %227 = vmatprep.mubr.f32.mxu0 0.0
    %228 = vmatmul.mubr.f32.gmra.mrb[0].mxu0 %v112
    %v229 = vpop.f32.mrb[0].mxu0
    %v230 = vadd.f32 0.0, %v229
    %v231 = vpop.f32.mrb[0].mxu0
    %232 = vmatprep.mubr.f32.mxu0 0.0
    %233 = vmatmul.mubr.f32.gmra.mrb[0].mxu0 %v115
    %v234 = vpop.f32.mrb[0].mxu0
    %v235 = vadd.f32 0.0, %v234
    %v236 = vpop.f32.mrb[0].mxu0
    %237 = vmatprep.mubr.f32.mxu0 0.0
    %238 = vmatmul.mubr.f32.gmra.mrb[0].mxu0 %v118
    %v239 = vpop.f32.mrb[0].mxu0
    %v240 = vadd.f32 0.0, %v239
    %v241 = vpop.f32.mrb[0].mxu0
    %242 = vmatprep.mubr.f32.mxu0 0.0
    %243 = vmatmul.mubr.f32.gmra.mrb[0].mxu0 %v121
    %v244 = vpop.f32.mrb[0].mxu0
    %v245 = vadd.f32 0.0, %v244
    %v246 = vpop.f32.mrb[0].mxu0
    %247 = vmatprep.mubr.f32.mxu0 0.0
    %248 = vmatmul.mubr.f32.gmra.mrb[0].mxu0 %v124
    %v249 = vpop.f32.mrb[0].mxu0
    %v250 = vadd.f32 0.0, %v249
    %v251 = vpop.f32.mrb[0].mxu0
    %252 = vmatprep.mubr.f32.mxu0 0.0
    %253 = vmatmul.mubr.f32.gmra.mrb[0].mxu0 %v127
    %v254 = vpop.f32.mrb[0].mxu0
    %v255 = vadd.f32 0.0, %v254
    %v256 = vpop.f32.mrb[0].mxu0
    %257 = vmatprep.mubr.f32.mxu0 0.0
    %258 = vmatmul.mubr.f32.gmra.mrb[0].mxu0 %v130
    %v259 = vpop.f32.mrb[0].mxu0
    %v260 = vadd.f32 0.0, %v259
    %v261 = vpop.f32.mrb[0].mxu0
    %262 = vmatprep.mubr.f32.mxu0 0.0
    %263 = vmatmul.mubr.f32.gmra.mrb[0].mxu0 %v133
    %v264 = vpop.f32.mrb[0].mxu0
    %v265 = vadd.f32 0.0, %v264
    %v266 = vpop.f32.mrb[0].mxu0
    %267 = vmatprep.mubr.f32.mxu0 0.0
    %268 = vmatmul.mubr.f32.gmra.mrb[0].mxu0 %v136
    %v269 = vpop.f32.mrb[0].mxu0
    %v270 = vadd.f32 0.0, %v269
    %v271 = vpop.f32.mrb[0].mxu0
    %272 = vmatprep.mubr.f32.mxu0 0.0
    %273 = vmatmul.mubr.f32.gmra.mrb[0].mxu0 %v139
    %v274 = vpop.f32.mrb[0].mxu0
    %v275 = vadd.f32 0.0, %v274
    %v276 = vpop.f32.mrb[0].mxu0
    %277 = vmatprep.mubr.f32.mxu0 0.0
    %278 = vmatmul.mubr.f32.gmra.mrb[0].mxu0 %v142
    %v279 = vpop.f32.mrb[0].mxu0
    %v280 = vadd.f32 0.0, %v279
    %v281 = vpop.f32.mrb[0].mxu0
    %282 = vmatprep.mubr.f32.mxu0 0.0
    %283 = vmatmul.mubr.f32.gmra.mrb[0].mxu0 %v145
    %v284 = vpop.f32.mrb[0].mxu0
    %v285 = vadd.f32 0.0, %v284
    %v286 = vpop.f32.mrb[0].mxu0
    %287 = vmatprep.mubr.f32.mxu0 0.0
    %288 = vmatmul.mubr.f32.gmra.mrb[0].mxu0 %v148
    %v289 = vpop.f32.mrb[0].mxu0
    %v290 = vadd.f32 0.0, %v289
    %v291 = vpop.f32.mrb[0].mxu0
    %292 = vmatprep.mubr.f32.mxu0 0.0
    %293 = vmatmul.mubr.f32.gmra.mrb[0].mxu0 %v151
    %v294 = vpop.f32.mrb[0].mxu0
    %v295 = vadd.f32 0.0, %v294
    %v296 = vpop.f32.mrb[0].mxu0
    %297 = vdwg.mxu0
    %v298 = vld [vmem:[%s7] sm:$0x1]
    %v299 = vld [vmem:[%s7 + $0x1] sm:$0x1]
    %v300 = vadd.f32 %v220, %v225
    %v301 = vadd.f32 %v300, %v230
    %v302 = vadd.f32 %v301, %v235
    %v303 = vadd.f32 %v302, %v240
    %v304 = vadd.f32 %v303, %v245
    %v305 = vadd.f32 %v304, %v250
    %v306 = vadd.f32 %v305, %v255
    %v307 = vadd.f32 %v306, %v260
    %v308 = vadd.f32 %v307, %v265
    %v309 = vadd.f32 %v308, %v270
    %v310 = vadd.f32 %v309, %v275
    %v311 = vadd.f32 %v310, %v280
    %v312 = vadd.f32 %v311, %v285
    %v313 = vadd.f32 %v312, %v290
    %v314 = vadd.f32 %v313, %v295
    %v315 = vrot.slane %v314, 4
    %v316 = vadd.f32 %v314, %v315
    %v317 = vrot.slane %v316, 2
    %v318 = vadd.f32 %v316, %v317
    %v319 = vrot.slane %v318, 1
    %v320 = vadd.f32 %v318, %v319
    %v321 = vmul.f32 %v220, %v220
    %v322 = vmul.f32 %v225, %v225
    %v323 = vmul.f32 %v230, %v230
    %v324 = vmul.f32 %v235, %v235
    %v325 = vmul.f32 %v240, %v240
    %v326 = vmul.f32 %v245, %v245
    %v327 = vmul.f32 %v250, %v250
    %v328 = vmul.f32 %v255, %v255
    %v329 = vmul.f32 %v260, %v260
    %v330 = vmul.f32 %v265, %v265
    %v331 = vmul.f32 %v270, %v270
    %v332 = vmul.f32 %v275, %v275
    %v333 = vmul.f32 %v280, %v280
    %v334 = vmul.f32 %v285, %v285
    %v335 = vmul.f32 %v290, %v290
    %v336 = vmul.f32 %v295, %v295
    %v337 = vadd.f32 %v321, %v322
    %v338 = vadd.f32 %v337, %v323
    %v339 = vadd.f32 %v338, %v324
    %v340 = vadd.f32 %v339, %v325
    %v341 = vadd.f32 %v340, %v326
    %v342 = vadd.f32 %v341, %v327
    %v343 = vadd.f32 %v342, %v328
    %v344 = vadd.f32 %v343, %v329
    %v345 = vadd.f32 %v344, %v330
    %v346 = vadd.f32 %v345, %v331
    %v347 = vadd.f32 %v346, %v332
    %v348 = vadd.f32 %v347, %v333
    %v349 = vadd.f32 %v348, %v334
    %v350 = vadd.f32 %v349, %v335
    %v351 = vadd.f32 %v350, %v336
    %v352 = vrot.slane %v351, 4
    %v353 = vadd.f32 %v351, %v352
    %v354 = vrot.slane %v353, 2
    %v355 = vadd.f32 %v353, %v354
    %v356 = vrot.slane %v355, 1
    %v357 = vadd.f32 %v355, %v356
    %v358 = vmul.f32 %v320, 0.0078125
    %v359 = vmul.f32 %v357, 0.0078125
    %v360 = vmul.f32 %v358, %v358
    %v361 = vsub.f32 %v359, %v360
    %v362 = vmax.f32 %v361, 0.0
    %v363 = vadd.f32 %v362, 1e-05
    %v364 = vrsqrt.pop %v363
    %v365 = vmul.f32 %v364, %v298
    %v366 = vmul.f32 %v358, %v365
    %v367 = vsub.f32 %v299, %v366
    %v368 = vlaneseq
    %v369 = vshrl.u32 %v368, 7
    %v370 = vsub.s32 0, %v369
    %v371 = vrot.slane %v365, %v370
    %v372 = vmul.f32 %v220, %v371
    %v373 = vmul.f32 %v225, %v371
    %v374 = vmul.f32 %v230, %v371
    %v375 = vmul.f32 %v235, %v371
    %v376 = vmul.f32 %v240, %v371
    %v377 = vmul.f32 %v245, %v371
    %v378 = vmul.f32 %v250, %v371
    %v379 = vmul.f32 %v255, %v371
    %v380 = vmul.f32 %v260, %v371
    %v381 = vmul.f32 %v265, %v371
    %v382 = vmul.f32 %v270, %v371
    %v383 = vmul.f32 %v275, %v371
    %v384 = vmul.f32 %v280, %v371
    %v385 = vmul.f32 %v285, %v371
    %v386 = vmul.f32 %v290, %v371
    %v387 = vmul.f32 %v295, %v371
    %v389 = vlaneseq
    %v390 = vshrl.u32 %v389, 7
    %v391 = vsub.s32 0, %v390
    %v392 = vrot.slane %v367, %v391
    %v394 = vadd.f32 %v372, %v392
    %v395 = vadd.f32 %v373, %v392
    %v396 = vadd.f32 %v374, %v392
    %v397 = vadd.f32 %v375, %v392
    %v398 = vadd.f32 %v376, %v392
    %v399 = vadd.f32 %v377, %v392
    %v400 = vadd.f32 %v378, %v392
    %v401 = vadd.f32 %v379, %v392
    %v402 = vadd.f32 %v380, %v392
    %v403 = vadd.f32 %v381, %v392
    %v404 = vadd.f32 %v382, %v392
    %v405 = vadd.f32 %v383, %v392
    %v406 = vadd.f32 %v384, %v392
    %v407 = vadd.f32 %v385, %v392
    %v408 = vadd.f32 %v386, %v392
    %v409 = vadd.f32 %v387, %v392
    %v410 = vmul.f32 %v394, 0.5
    %v411 = vmul.f32 %v395, 0.5
    %v412 = vmul.f32 %v396, 0.5
    %v413 = vmul.f32 %v397, 0.5
    %v414 = vmul.f32 %v398, 0.5
    %v415 = vmul.f32 %v399, 0.5
    %v416 = vmul.f32 %v400, 0.5
    %v417 = vmul.f32 %v401, 0.5
    %v418 = vmul.f32 %v402, 0.5
    %v419 = vmul.f32 %v403, 0.5
    %v420 = vmul.f32 %v404, 0.5
    %v421 = vmul.f32 %v405, 0.5
    %v422 = vmul.f32 %v406, 0.5
    %v423 = vmul.f32 %v407, 0.5
    %v424 = vmul.f32 %v408, 0.5
    %v425 = vmul.f32 %v409, 0.5
    %v426 = vtanh.pop %v410
    %v427 = vtanh.pop %v411
    %v428 = vtanh.pop %v412
    %v429 = vtanh.pop %v413
    %v430 = vtanh.pop %v414
    %v431 = vtanh.pop %v415
    %v432 = vtanh.pop %v416
    %v433 = vtanh.pop %v417
    %v434 = vtanh.pop %v418
    %v435 = vtanh.pop %v419
    %v436 = vtanh.pop %v420
    %v437 = vtanh.pop %v421
    %v438 = vtanh.pop %v422
    %v439 = vtanh.pop %v423
    %v440 = vtanh.pop %v424
    %v441 = vtanh.pop %v425
    %v442 = vmul.f32 %v426, 0.5
    %v443 = vmul.f32 %v427, 0.5
    %v444 = vmul.f32 %v428, 0.5
    %v445 = vmul.f32 %v429, 0.5
    %v446 = vmul.f32 %v430, 0.5
    %v447 = vmul.f32 %v431, 0.5
    %v448 = vmul.f32 %v432, 0.5
    %v449 = vmul.f32 %v433, 0.5
    %v450 = vmul.f32 %v434, 0.5
    %v451 = vmul.f32 %v435, 0.5
    %v452 = vmul.f32 %v436, 0.5
    %v453 = vmul.f32 %v437, 0.5
    %v454 = vmul.f32 %v438, 0.5
    %v455 = vmul.f32 %v439, 0.5
    %v456 = vmul.f32 %v440, 0.5
    %v457 = vmul.f32 %v441, 0.5
    %v458 = vadd.f32 %v442, 0.5
    %v459 = vadd.f32 %v443, 0.5
    %v460 = vadd.f32 %v444, 0.5
    %v461 = vadd.f32 %v445, 0.5
    %v462 = vadd.f32 %v446, 0.5
    %v463 = vadd.f32 %v447, 0.5
    %v464 = vadd.f32 %v448, 0.5
    %v465 = vadd.f32 %v449, 0.5
    %v466 = vadd.f32 %v450, 0.5
    %v467 = vadd.f32 %v451, 0.5
    %v468 = vadd.f32 %v452, 0.5
    %v469 = vadd.f32 %v453, 0.5
    %v470 = vadd.f32 %v454, 0.5
    %v471 = vadd.f32 %v455, 0.5
    %v472 = vadd.f32 %v456, 0.5
    %v473 = vadd.f32 %v457, 0.5
    %v474 = vld [vmem:[%s2] sm:$0xff]
    %v475 = vld [vmem:[%s2 + $0x8] sm:$0xff]
    %v476 = vld [vmem:[%s2 + $0x10] sm:$0xff]
    %v477 = vld [vmem:[%s2 + $0x18] sm:$0xff]
    %v478 = vld [vmem:[%s2 + $0x20] sm:$0xff]
    %v479 = vld [vmem:[%s2 + $0x28] sm:$0xff]
    %v480 = vld [vmem:[%s2 + $0x30] sm:$0xff]
    %v481 = vld [vmem:[%s2 + $0x38] sm:$0xff]
    %v482 = vld [vmem:[%s2 + $0x40] sm:$0xff]
    %v483 = vld [vmem:[%s2 + $0x48] sm:$0xff]
    %v484 = vld [vmem:[%s2 + $0x50] sm:$0xff]
    %v485 = vld [vmem:[%s2 + $0x58] sm:$0xff]
    %v486 = vld [vmem:[%s2 + $0x60] sm:$0xff]
    %v487 = vld [vmem:[%s2 + $0x68] sm:$0xff]
    %v488 = vld [vmem:[%s2 + $0x70] sm:$0xff]
    %v489 = vld [vmem:[%s2 + $0x78] sm:$0xff]
    %490 = vmatprep.subr.mxu0 0.0
    %491 = vmatpush1.msra.mxu0 %v474
    %492 = vmatprep.subr.mxu0 0.0
    %493 = vmatpush1.msra.mxu0 %v475
    %494 = vmatprep.subr.mxu0 0.0
    %495 = vmatpush1.msra.mxu0 %v476
    %496 = vmatprep.subr.mxu0 0.0
    %497 = vmatpush1.msra.mxu0 %v477
    %498 = vmatprep.subr.mxu0 0.0
    %499 = vmatpush1.msra.mxu0 %v478
    %500 = vmatprep.subr.mxu0 0.0
    %501 = vmatpush1.msra.mxu0 %v479
    %502 = vmatprep.subr.mxu0 0.0
    %503 = vmatpush1.msra.mxu0 %v480
    %504 = vmatprep.subr.mxu0 0.0
    %505 = vmatpush1.msra.mxu0 %v481
    %506 = vmatprep.subr.mxu0 0.0
    %507 = vmatpush1.msra.mxu0 %v482
    %508 = vmatprep.subr.mxu0 0.0
    %509 = vmatpush1.msra.mxu0 %v483
    %510 = vmatprep.subr.mxu0 0.0
    %511 = vmatpush1.msra.mxu0 %v484
    %512 = vmatprep.subr.mxu0 0.0
    %513 = vmatpush1.msra.mxu0 %v485
    %514 = vmatprep.subr.mxu0 0.0
    %515 = vmatpush1.msra.mxu0 %v486
    %516 = vmatprep.subr.mxu0 0.0
    %517 = vmatpush1.msra.mxu0 %v487
    %518 = vmatprep.subr.mxu0 0.0
    %519 = vmatpush1.msra.mxu0 %v488
    %520 = vmatprep.subr.mxu0 0.0
    %521 = vmatpush1.msra.mxu0 %v489
    %522 = vmatprep.subr.mxu0 0.0
    %523 = vmatpush1.msra.mxu0 0.0
    %524 = vmatprep.subr.mxu0 0.0
    %525 = vmatpush1.msra.mxu0 0.0
    %526 = vmatprep.subr.mxu0 0.0
    %527 = vmatpush1.msra.mxu0 0.0
    %528 = vmatprep.subr.mxu0 0.0
    %529 = vmatpush1.msra.mxu0 0.0
    %530 = vmatprep.subr.mxu0 0.0
    %531 = vmatpush1.msra.mxu0 0.0
    %532 = vmatprep.subr.mxu0 0.0
    %533 = vmatpush1.msra.mxu0 0.0
    %534 = vmatprep.subr.mxu0 0.0
    %535 = vmatpush1.msra.mxu0 0.0
    %536 = vmatprep.subr.mxu0 0.0
    %537 = vmatpush1.msra.mxu0 0.0
    %538 = vmatprep.subr.mxu0 0.0
    %539 = vmatpush1.msra.mxu0 0.0
    %540 = vmatprep.subr.mxu0 0.0
    %541 = vmatpush1.msra.mxu0 0.0
    %542 = vmatprep.subr.mxu0 0.0
    %543 = vmatpush1.msra.mxu0 0.0
    %544 = vmatprep.subr.mxu0 0.0
    %545 = vmatpush1.msra.mxu0 0.0
    %546 = vmatprep.subr.mxu0 0.0
    %547 = vmatpush1.msra.mxu0 0.0
    %548 = vmatprep.subr.mxu0 0.0
    %549 = vmatpush1.msra.mxu0 0.0
    %550 = vmatprep.subr.mxu0 0.0
    %551 = vmatpush1.msra.mxu0 0.0
    %552 = vmatprep.subr.mxu0 0.0
    %553 = vmatpush1.msra.mxu0 0.0
    %554 = vmatprep.mubr.f32.mxu0 0.0
    %555 = vmatmul.mubr.f32.gmra.mrb[0].mxu0 %v458
    %v556 = vpop.f32.mrb[0].mxu0
    %v557 = vadd.f32 0.0, %v556
    %v558 = vpop.f32.mrb[0].mxu0
    %559 = vmatprep.mubr.f32.mxu0 0.0
    %560 = vmatmul.mubr.f32.gmra.mrb[0].mxu0 %v459
    %v561 = vpop.f32.mrb[0].mxu0
    %v562 = vadd.f32 0.0, %v561
    %v563 = vpop.f32.mrb[0].mxu0
    %564 = vmatprep.mubr.f32.mxu0 0.0
    %565 = vmatmul.mubr.f32.gmra.mrb[0].mxu0 %v460
    %v566 = vpop.f32.mrb[0].mxu0
    %v567 = vadd.f32 0.0, %v566
    %v568 = vpop.f32.mrb[0].mxu0
    %569 = vmatprep.mubr.f32.mxu0 0.0
    %570 = vmatmul.mubr.f32.gmra.mrb[0].mxu0 %v461
    %v571 = vpop.f32.mrb[0].mxu0
    %v572 = vadd.f32 0.0, %v571
    %v573 = vpop.f32.mrb[0].mxu0
    %574 = vmatprep.mubr.f32.mxu0 0.0
    %575 = vmatmul.mubr.f32.gmra.mrb[0].mxu0 %v462
    %v576 = vpop.f32.mrb[0].mxu0
    %v577 = vadd.f32 0.0, %v576
    %v578 = vpop.f32.mrb[0].mxu0
    %579 = vmatprep.mubr.f32.mxu0 0.0
    %580 = vmatmul.mubr.f32.gmra.mrb[0].mxu0 %v463
    %v581 = vpop.f32.mrb[0].mxu0
    %v582 = vadd.f32 0.0, %v581
    %v583 = vpop.f32.mrb[0].mxu0
    %584 = vmatprep.mubr.f32.mxu0 0.0
    %585 = vmatmul.mubr.f32.gmra.mrb[0].mxu0 %v464
    %v586 = vpop.f32.mrb[0].mxu0
    %v587 = vadd.f32 0.0, %v586
    %v588 = vpop.f32.mrb[0].mxu0
    %589 = vmatprep.mubr.f32.mxu0 0.0
    %590 = vmatmul.mubr.f32.gmra.mrb[0].mxu0 %v465
    %v591 = vpop.f32.mrb[0].mxu0
    %v592 = vadd.f32 0.0, %v591
    %v593 = vpop.f32.mrb[0].mxu0
    %594 = vmatprep.mubr.f32.mxu0 0.0
    %595 = vmatmul.mubr.f32.gmra.mrb[0].mxu0 %v466
    %v596 = vpop.f32.mrb[0].mxu0
    %v597 = vadd.f32 0.0, %v596
    %v598 = vpop.f32.mrb[0].mxu0
    %599 = vmatprep.mubr.f32.mxu0 0.0
    %600 = vmatmul.mubr.f32.gmra.mrb[0].mxu0 %v467
    %v601 = vpop.f32.mrb[0].mxu0
    %v602 = vadd.f32 0.0, %v601
    %v603 = vpop.f32.mrb[0].mxu0
    %604 = vmatprep.mubr.f32.mxu0 0.0
    %605 = vmatmul.mubr.f32.gmra.mrb[0].mxu0 %v468
    %v606 = vpop.f32.mrb[0].mxu0
    %v607 = vadd.f32 0.0, %v606
    %v608 = vpop.f32.mrb[0].mxu0
    %609 = vmatprep.mubr.f32.mxu0 0.0
    %610 = vmatmul.mubr.f32.gmra.mrb[0].mxu0 %v469
    %v611 = vpop.f32.mrb[0].mxu0
    %v612 = vadd.f32 0.0, %v611
    %v613 = vpop.f32.mrb[0].mxu0
    %614 = vmatprep.mubr.f32.mxu0 0.0
    %615 = vmatmul.mubr.f32.gmra.mrb[0].mxu0 %v470
    %v616 = vpop.f32.mrb[0].mxu0
    %v617 = vadd.f32 0.0, %v616
    %v618 = vpop.f32.mrb[0].mxu0
    %619 = vmatprep.mubr.f32.mxu0 0.0
    %620 = vmatmul.mubr.f32.gmra.mrb[0].mxu0 %v471
    %v621 = vpop.f32.mrb[0].mxu0
    %v622 = vadd.f32 0.0, %v621
    %v623 = vpop.f32.mrb[0].mxu0
    %624 = vmatprep.mubr.f32.mxu0 0.0
    %625 = vmatmul.mubr.f32.gmra.mrb[0].mxu0 %v472
    %v626 = vpop.f32.mrb[0].mxu0
    %v627 = vadd.f32 0.0, %v626
    %v628 = vpop.f32.mrb[0].mxu0
    %629 = vmatprep.mubr.f32.mxu0 0.0
    %630 = vmatmul.mubr.f32.gmra.mrb[0].mxu0 %v473
    %v631 = vpop.f32.mrb[0].mxu0
    %v632 = vadd.f32 0.0, %v631
    %v633 = vpop.f32.mrb[0].mxu0
    %634 = vdwg.mxu0
    %v635 = vld [vmem:[%s7 + $0x2] sm:$0x1]
    %v636 = vld [vmem:[%s7 + $0x3] sm:$0x1]
    %v637 = vadd.f32 %v557, %v562
    %v638 = vadd.f32 %v637, %v567
    %v639 = vadd.f32 %v638, %v572
    %v640 = vadd.f32 %v639, %v577
    %v641 = vadd.f32 %v640, %v582
    %v642 = vadd.f32 %v641, %v587
    %v643 = vadd.f32 %v642, %v592
    %v644 = vadd.f32 %v643, %v597
    %v645 = vadd.f32 %v644, %v602
    %v646 = vadd.f32 %v645, %v607
    %v647 = vadd.f32 %v646, %v612
    %v648 = vadd.f32 %v647, %v617
    %v649 = vadd.f32 %v648, %v622
    %v650 = vadd.f32 %v649, %v627
    %v651 = vadd.f32 %v650, %v632
    %v652 = vrot.slane %v651, 4
    %v653 = vadd.f32 %v651, %v652
    %v654 = vrot.slane %v653, 2
    %v655 = vadd.f32 %v653, %v654
    %v656 = vrot.slane %v655, 1
    %v657 = vadd.f32 %v655, %v656
    %v658 = vmul.f32 %v557, %v557
    %v659 = vmul.f32 %v562, %v562
    %v660 = vmul.f32 %v567, %v567
    %v661 = vmul.f32 %v572, %v572
    %v662 = vmul.f32 %v577, %v577
    %v663 = vmul.f32 %v582, %v582
    %v664 = vmul.f32 %v587, %v587
    %v665 = vmul.f32 %v592, %v592
    %v666 = vmul.f32 %v597, %v597
    %v667 = vmul.f32 %v602, %v602
    %v668 = vmul.f32 %v607, %v607
    %v669 = vmul.f32 %v612, %v612
    %v670 = vmul.f32 %v617, %v617
    %v671 = vmul.f32 %v622, %v622
    %v672 = vmul.f32 %v627, %v627
    %v673 = vmul.f32 %v632, %v632
    %v674 = vadd.f32 %v658, %v659
    %v675 = vadd.f32 %v674, %v660
    %v676 = vadd.f32 %v675, %v661
    %v677 = vadd.f32 %v676, %v662
    %v678 = vadd.f32 %v677, %v663
    %v679 = vadd.f32 %v678, %v664
    %v680 = vadd.f32 %v679, %v665
    %v681 = vadd.f32 %v680, %v666
    %v682 = vadd.f32 %v681, %v667
    %v683 = vadd.f32 %v682, %v668
    %v684 = vadd.f32 %v683, %v669
    %v685 = vadd.f32 %v684, %v670
    %v686 = vadd.f32 %v685, %v671
    %v687 = vadd.f32 %v686, %v672
    %v688 = vadd.f32 %v687, %v673
    %v689 = vrot.slane %v688, 4
    %v690 = vadd.f32 %v688, %v689
    %v691 = vrot.slane %v690, 2
    %v692 = vadd.f32 %v690, %v691
    %v693 = vrot.slane %v692, 1
    %v694 = vadd.f32 %v692, %v693
    %v695 = vmul.f32 %v657, 0.0078125
    %v696 = vmul.f32 %v694, 0.0078125
    %v697 = vmul.f32 %v695, %v695
    %v698 = vsub.f32 %v696, %v697
    %v699 = vmax.f32 %v698, 0.0
    %v700 = vadd.f32 %v699, 1e-05
    %v701 = vrsqrt.pop %v700
    %v702 = vmul.f32 %v701, %v635
    %v703 = vmul.f32 %v695, %v702
    %v704 = vsub.f32 %v636, %v703
    %v705 = vlaneseq
    %v706 = vshrl.u32 %v705, 7
    %v707 = vsub.s32 0, %v706
    %v708 = vrot.slane %v702, %v707
    %v709 = vmul.f32 %v557, %v708
    %v710 = vmul.f32 %v562, %v708
    %v711 = vmul.f32 %v567, %v708
    %v712 = vmul.f32 %v572, %v708
    %v713 = vmul.f32 %v577, %v708
    %v714 = vmul.f32 %v582, %v708
    %v715 = vmul.f32 %v587, %v708
    %v716 = vmul.f32 %v592, %v708
    %v717 = vmul.f32 %v597, %v708
    %v718 = vmul.f32 %v602, %v708
    %v719 = vmul.f32 %v607, %v708
    %v720 = vmul.f32 %v612, %v708
    %v721 = vmul.f32 %v617, %v708
    %v722 = vmul.f32 %v622, %v708
    %v723 = vmul.f32 %v627, %v708
    %v724 = vmul.f32 %v632, %v708
    %v726 = vlaneseq
    %v727 = vshrl.u32 %v726, 7
    %v728 = vsub.s32 0, %v727
    %v729 = vrot.slane %v704, %v728
    %v731 = vadd.f32 %v709, %v729
    %v732 = vadd.f32 %v710, %v729
    %v733 = vadd.f32 %v711, %v729
    %v734 = vadd.f32 %v712, %v729
    %v735 = vadd.f32 %v713, %v729
    %v736 = vadd.f32 %v714, %v729
    %v737 = vadd.f32 %v715, %v729
    %v738 = vadd.f32 %v716, %v729
    %v739 = vadd.f32 %v717, %v729
    %v740 = vadd.f32 %v718, %v729
    %v741 = vadd.f32 %v719, %v729
    %v742 = vadd.f32 %v720, %v729
    %v743 = vadd.f32 %v721, %v729
    %v744 = vadd.f32 %v722, %v729
    %v745 = vadd.f32 %v723, %v729
    %v746 = vadd.f32 %v724, %v729
    %v747 = vmul.f32 %v731, 0.5
    %v748 = vmul.f32 %v732, 0.5
    %v749 = vmul.f32 %v733, 0.5
    %v750 = vmul.f32 %v734, 0.5
    %v751 = vmul.f32 %v735, 0.5
    %v752 = vmul.f32 %v736, 0.5
    %v753 = vmul.f32 %v737, 0.5
    %v754 = vmul.f32 %v738, 0.5
    %v755 = vmul.f32 %v739, 0.5
    %v756 = vmul.f32 %v740, 0.5
    %v757 = vmul.f32 %v741, 0.5
    %v758 = vmul.f32 %v742, 0.5
    %v759 = vmul.f32 %v743, 0.5
    %v760 = vmul.f32 %v744, 0.5
    %v761 = vmul.f32 %v745, 0.5
    %v762 = vmul.f32 %v746, 0.5
    %v763 = vtanh.pop %v747
    %v764 = vtanh.pop %v748
    %v765 = vtanh.pop %v749
    %v766 = vtanh.pop %v750
    %v767 = vtanh.pop %v751
    %v768 = vtanh.pop %v752
    %v769 = vtanh.pop %v753
    %v770 = vtanh.pop %v754
    %v771 = vtanh.pop %v755
    %v772 = vtanh.pop %v756
    %v773 = vtanh.pop %v757
    %v774 = vtanh.pop %v758
    %v775 = vtanh.pop %v759
    %v776 = vtanh.pop %v760
    %v777 = vtanh.pop %v761
    %v778 = vtanh.pop %v762
    %v779 = vmul.f32 %v763, 0.5
    %v780 = vmul.f32 %v764, 0.5
    %v781 = vmul.f32 %v765, 0.5
    %v782 = vmul.f32 %v766, 0.5
    %v783 = vmul.f32 %v767, 0.5
    %v784 = vmul.f32 %v768, 0.5
    %v785 = vmul.f32 %v769, 0.5
    %v786 = vmul.f32 %v770, 0.5
    %v787 = vmul.f32 %v771, 0.5
    %v788 = vmul.f32 %v772, 0.5
    %v789 = vmul.f32 %v773, 0.5
    %v790 = vmul.f32 %v774, 0.5
    %v791 = vmul.f32 %v775, 0.5
    %v792 = vmul.f32 %v776, 0.5
    %v793 = vmul.f32 %v777, 0.5
    %v794 = vmul.f32 %v778, 0.5
    %v795 = vadd.f32 %v779, 0.5
    %v796 = vadd.f32 %v780, 0.5
    %v797 = vadd.f32 %v781, 0.5
    %v798 = vadd.f32 %v782, 0.5
    %v799 = vadd.f32 %v783, 0.5
    %v800 = vadd.f32 %v784, 0.5
    %v801 = vadd.f32 %v785, 0.5
    %v802 = vadd.f32 %v786, 0.5
    %v803 = vadd.f32 %v787, 0.5
    %v804 = vadd.f32 %v788, 0.5
    %v805 = vadd.f32 %v789, 0.5
    %v806 = vadd.f32 %v790, 0.5
    %v807 = vadd.f32 %v791, 0.5
    %v808 = vadd.f32 %v792, 0.5
    %v809 = vadd.f32 %v793, 0.5
    %v810 = vadd.f32 %v794, 0.5
    %v811 = vld [vmem:[#allocation2] sm:$0xff]
    %v812 = vld [vmem:[#allocation2 + $0x8] sm:$0xff]
    %v813 = vld [vmem:[#allocation2 + $0x10] sm:$0xff]
    %v814 = vld [vmem:[#allocation2 + $0x18] sm:$0xff]
    %v815 = vld [vmem:[#allocation2 + $0x20] sm:$0xff]
    %v816 = vld [vmem:[#allocation2 + $0x28] sm:$0xff]
    %v817 = vld [vmem:[#allocation2 + $0x30] sm:$0xff]
    %v818 = vld [vmem:[#allocation2 + $0x38] sm:$0xff]
    %v819 = vld [vmem:[#allocation2 + $0x40] sm:$0xff]
    %v820 = vld [vmem:[#allocation2 + $0x48] sm:$0xff]
    %v821 = vld [vmem:[#allocation2 + $0x50] sm:$0xff]
    %v822 = vld [vmem:[#allocation2 + $0x58] sm:$0xff]
    %v823 = vld [vmem:[#allocation2 + $0x60] sm:$0xff]
    %v824 = vld [vmem:[#allocation2 + $0x68] sm:$0xff]
    %v825 = vld [vmem:[#allocation2 + $0x70] sm:$0xff]
    %v826 = vld [vmem:[#allocation2 + $0x78] sm:$0xff]
    %v827 = vld [vmem:[#allocation2 + $0x80] sm:$0xff]
    %v828 = vld [vmem:[#allocation2 + $0x88] sm:$0xff]
    %v829 = vld [vmem:[#allocation2 + $0x90] sm:$0xff]
    %v830 = vld [vmem:[#allocation2 + $0x98] sm:$0xff]
    %v831 = vld [vmem:[#allocation2 + $0xa0] sm:$0xff]
    %v832 = vld [vmem:[#allocation2 + $0xa8] sm:$0xff]
    %v833 = vld [vmem:[#allocation2 + $0xb0] sm:$0xff]
    %v834 = vld [vmem:[#allocation2 + $0xb8] sm:$0xff]
    %v835 = vld [vmem:[#allocation2 + $0xc0] sm:$0xff]
    %v836 = vld [vmem:[#allocation2 + $0xc8] sm:$0xff]
    %v837 = vld [vmem:[#allocation2 + $0xd0] sm:$0xff]
    %v838 = vld [vmem:[#allocation2 + $0xd8] sm:$0xff]
    %v839 = vld [vmem:[#allocation2 + $0xe0] sm:$0xff]
    %v840 = vld [vmem:[#allocation2 + $0xe8] sm:$0xff]
    %v841 = vld [vmem:[#allocation2 + $0xf0] sm:$0xff]
    %v842 = vld [vmem:[#allocation2 + $0xf8] sm:$0xff]
    %843 = vmatprep.subr.mxu0 %v812
    %844 = vmatpush1.msra.mxu0 %v811
    %845 = vmatprep.subr.mxu0 %v814
    %846 = vmatpush1.msra.mxu0 %v813
    %847 = vmatprep.subr.mxu0 %v816
    %848 = vmatpush1.msra.mxu0 %v815
    %849 = vmatprep.subr.mxu0 %v818
    %850 = vmatpush1.msra.mxu0 %v817
    %851 = vmatprep.subr.mxu0 %v820
    %852 = vmatpush1.msra.mxu0 %v819
    %853 = vmatprep.subr.mxu0 %v822
    %854 = vmatpush1.msra.mxu0 %v821
    %855 = vmatprep.subr.mxu0 %v824
    %856 = vmatpush1.msra.mxu0 %v823
    %857 = vmatprep.subr.mxu0 %v826
    %858 = vmatpush1.msra.mxu0 %v825
    %859 = vmatprep.subr.mxu0 %v828
    %860 = vmatpush1.msra.mxu0 %v827
    %861 = vmatprep.subr.mxu0 %v830
    %862 = vmatpush1.msra.mxu0 %v829
    %863 = vmatprep.subr.mxu0 %v832
    %864 = vmatpush1.msra.mxu0 %v831
    %865 = vmatprep.subr.mxu0 %v834
    %866 = vmatpush1.msra.mxu0 %v833
    %867 = vmatprep.subr.mxu0 %v836
    %868 = vmatpush1.msra.mxu0 %v835
    %869 = vmatprep.subr.mxu0 %v838
    %870 = vmatpush1.msra.mxu0 %v837
    %871 = vmatprep.subr.mxu0 %v840
    %872 = vmatpush1.msra.mxu0 %v839
    %873 = vmatprep.subr.mxu0 %v842
    %874 = vmatpush1.msra.mxu0 %v841
    %875 = vmatprep.subr.mxu0 0.0
    %876 = vmatpush1.msra.mxu0 0.0
    %877 = vmatprep.subr.mxu0 0.0
    %878 = vmatpush1.msra.mxu0 0.0
    %879 = vmatprep.subr.mxu0 0.0
    %880 = vmatpush1.msra.mxu0 0.0
    %881 = vmatprep.subr.mxu0 0.0
    %882 = vmatpush1.msra.mxu0 0.0
    %883 = vmatprep.subr.mxu0 0.0
    %884 = vmatpush1.msra.mxu0 0.0
    %885 = vmatprep.subr.mxu0 0.0
    %886 = vmatpush1.msra.mxu0 0.0
    %887 = vmatprep.subr.mxu0 0.0
    %888 = vmatpush1.msra.mxu0 0.0
    %889 = vmatprep.subr.mxu0 0.0
    %890 = vmatpush1.msra.mxu0 0.0
    %891 = vmatprep.subr.mxu0 0.0
    %892 = vmatpush1.msra.mxu0 0.0
    %893 = vmatprep.subr.mxu0 0.0
    %894 = vmatpush1.msra.mxu0 0.0
    %895 = vmatprep.subr.mxu0 0.0
    %896 = vmatpush1.msra.mxu0 0.0
    %897 = vmatprep.subr.mxu0 0.0
    %898 = vmatpush1.msra.mxu0 0.0
    %899 = vmatprep.subr.mxu0 0.0
    %900 = vmatpush1.msra.mxu0 0.0
    %901 = vmatprep.subr.mxu0 0.0
    %902 = vmatpush1.msra.mxu0 0.0
    %903 = vmatprep.subr.mxu0 0.0
    %904 = vmatpush1.msra.mxu0 0.0
    %905 = vmatprep.subr.mxu0 0.0
    %906 = vmatpush1.msra.mxu0 0.0
    %907 = vmatprep.mubr.f32.mxu0 0.0
    %908 = vmatmul.mubr.f32.gmra.mrb[0].mxu0 %v795
    %v909 = vpop.f32.mrb[0].mxu0
    %v910 = vadd.f32 0.0, %v909
    %v911 = vpop.f32.mrb[0].mxu0
    %v912 = vadd.f32 0.0, %v911
    %913 = vmatprep.mubr.f32.mxu0 0.0
    %914 = vmatmul.mubr.f32.gmra.mrb[0].mxu0 %v796
    %v915 = vpop.f32.mrb[0].mxu0
    %v916 = vadd.f32 0.0, %v915
    %v917 = vpop.f32.mrb[0].mxu0
    %v918 = vadd.f32 0.0, %v917
    %919 = vmatprep.mubr.f32.mxu0 0.0
    %920 = vmatmul.mubr.f32.gmra.mrb[0].mxu0 %v797
    %v921 = vpop.f32.mrb[0].mxu0
    %v922 = vadd.f32 0.0, %v921
    %v923 = vpop.f32.mrb[0].mxu0
    %v924 = vadd.f32 0.0, %v923
    %925 = vmatprep.mubr.f32.mxu0 0.0
    %926 = vmatmul.mubr.f32.gmra.mrb[0].mxu0 %v798
    %v927 = vpop.f32.mrb[0].mxu0
    %v928 = vadd.f32 0.0, %v927
    %v929 = vpop.f32.mrb[0].mxu0
    %v930 = vadd.f32 0.0, %v929
    %931 = vmatprep.mubr.f32.mxu0 0.0
    %932 = vmatmul.mubr.f32.gmra.mrb[0].mxu0 %v799
    %v933 = vpop.f32.mrb[0].mxu0
    %v934 = vadd.f32 0.0, %v933
    %v935 = vpop.f32.mrb[0].mxu0
    %v936 = vadd.f32 0.0, %v935
    %937 = vmatprep.mubr.f32.mxu0 0.0
    %938 = vmatmul.mubr.f32.gmra.mrb[0].mxu0 %v800
    %v939 = vpop.f32.mrb[0].mxu0
    %v940 = vadd.f32 0.0, %v939
    %v941 = vpop.f32.mrb[0].mxu0
    %v942 = vadd.f32 0.0, %v941
    %943 = vmatprep.mubr.f32.mxu0 0.0
    %944 = vmatmul.mubr.f32.gmra.mrb[0].mxu0 %v801
    %v945 = vpop.f32.mrb[0].mxu0
    %v946 = vadd.f32 0.0, %v945
    %v947 = vpop.f32.mrb[0].mxu0
    %v948 = vadd.f32 0.0, %v947
    %949 = vmatprep.mubr.f32.mxu0 0.0
    %950 = vmatmul.mubr.f32.gmra.mrb[0].mxu0 %v802
    %v951 = vpop.f32.mrb[0].mxu0
    %v952 = vadd.f32 0.0, %v951
    %v953 = vpop.f32.mrb[0].mxu0
    %v954 = vadd.f32 0.0, %v953
    %955 = vmatprep.mubr.f32.mxu0 0.0
    %956 = vmatmul.mubr.f32.gmra.mrb[0].mxu0 %v803
    %v957 = vpop.f32.mrb[0].mxu0
    %v958 = vadd.f32 0.0, %v957
    %v959 = vpop.f32.mrb[0].mxu0
    %v960 = vadd.f32 0.0, %v959
    %961 = vmatprep.mubr.f32.mxu0 0.0
    %962 = vmatmul.mubr.f32.gmra.mrb[0].mxu0 %v804
    %v963 = vpop.f32.mrb[0].mxu0
    %v964 = vadd.f32 0.0, %v963
    %v965 = vpop.f32.mrb[0].mxu0
    %v966 = vadd.f32 0.0, %v965
    %967 = vmatprep.mubr.f32.mxu0 0.0
    %968 = vmatmul.mubr.f32.gmra.mrb[0].mxu0 %v805
    %v969 = vpop.f32.mrb[0].mxu0
    %v970 = vadd.f32 0.0, %v969
    %v971 = vpop.f32.mrb[0].mxu0
    %v972 = vadd.f32 0.0, %v971
    %973 = vmatprep.mubr.f32.mxu0 0.0
    %974 = vmatmul.mubr.f32.gmra.mrb[0].mxu0 %v806
    %v975 = vpop.f32.mrb[0].mxu0
    %v976 = vadd.f32 0.0, %v975
    %v977 = vpop.f32.mrb[0].mxu0
    %v978 = vadd.f32 0.0, %v977
    %979 = vmatprep.mubr.f32.mxu0 0.0
    %980 = vmatmul.mubr.f32.gmra.mrb[0].mxu0 %v807
    %v981 = vpop.f32.mrb[0].mxu0
    %v982 = vadd.f32 0.0, %v981
    %v983 = vpop.f32.mrb[0].mxu0
    %v984 = vadd.f32 0.0, %v983
    %985 = vmatprep.mubr.f32.mxu0 0.0
    %986 = vmatmul.mubr.f32.gmra.mrb[0].mxu0 %v808
    %v987 = vpop.f32.mrb[0].mxu0
    %v988 = vadd.f32 0.0, %v987
    %v989 = vpop.f32.mrb[0].mxu0
    %v990 = vadd.f32 0.0, %v989
    %991 = vmatprep.mubr.f32.mxu0 0.0
    %992 = vmatmul.mubr.f32.gmra.mrb[0].mxu0 %v809
    %v993 = vpop.f32.mrb[0].mxu0
    %v994 = vadd.f32 0.0, %v993
    %v995 = vpop.f32.mrb[0].mxu0
    %v996 = vadd.f32 0.0, %v995
    %997 = vmatprep.mubr.f32.mxu0 0.0
    %998 = vmatmul.mubr.f32.gmra.mrb[0].mxu0 %v810
    %v999 = vpop.f32.mrb[0].mxu0
    %v1000 = vadd.f32 0.0, %v999
    %v1001 = vpop.f32.mrb[0].mxu0
    %v1002 = vadd.f32 0.0, %v1001
    %1003 = vdwg.mxu0
    %v1004 = vld [vmem:[%s7 + $0x4] sm:$0x3]
    %v1005 = vld [vmem:[%s7 + $0x6] sm:$0x3]
    %v1006 = vadd.f32 %v910, %v916
    %v1007 = vadd.f32 %v1006, %v922
    %v1008 = vadd.f32 %v1007, %v928
    %v1009 = vadd.f32 %v1008, %v934
    %v1010 = vadd.f32 %v1009, %v940
    %v1011 = vadd.f32 %v1010, %v946
    %v1012 = vadd.f32 %v1011, %v952
    %v1013 = vadd.f32 %v1012, %v958
    %v1014 = vadd.f32 %v1013, %v964
    %v1015 = vadd.f32 %v1014, %v970
    %v1016 = vadd.f32 %v1015, %v976
    %v1017 = vadd.f32 %v1016, %v982
    %v1018 = vadd.f32 %v1017, %v988
    %v1019 = vadd.f32 %v1018, %v994
    %v1020 = vadd.f32 %v1019, %v1000
    %v1021 = vrot.slane %v1020, 4
    %v1022 = vadd.f32 %v1020, %v1021
    %v1023 = vrot.slane %v1022, 2
    %v1024 = vadd.f32 %v1022, %v1023
    %v1025 = vrot.slane %v1024, 1
    %v1026 = vadd.f32 %v1024, %v1025
    %v1027 = vadd.f32 %v912, %v918
    %v1028 = vadd.f32 %v1027, %v924
    %v1029 = vadd.f32 %v1028, %v930
    %v1030 = vadd.f32 %v1029, %v936
    %v1031 = vadd.f32 %v1030, %v942
    %v1032 = vadd.f32 %v1031, %v948
    %v1033 = vadd.f32 %v1032, %v954
    %v1034 = vadd.f32 %v1033, %v960
    %v1035 = vadd.f32 %v1034, %v966
    %v1036 = vadd.f32 %v1035, %v972
    %v1037 = vadd.f32 %v1036, %v978
    %v1038 = vadd.f32 %v1037, %v984
    %v1039 = vadd.f32 %v1038, %v990
    %v1040 = vadd.f32 %v1039, %v996
    %v1041 = vadd.f32 %v1040, %v1002
    %v1042 = vrot.slane %v1041, 4
    %v1043 = vadd.f32 %v1041, %v1042
    %v1044 = vrot.slane %v1043, 2
    %v1045 = vadd.f32 %v1043, %v1044
    %v1046 = vrot.slane %v1045, 1
    %v1047 = vadd.f32 %v1045, %v1046
    %v1048 = vmul.f32 %v910, %v910
    %v1049 = vmul.f32 %v912, %v912
    %v1050 = vmul.f32 %v916, %v916
    %v1051 = vmul.f32 %v918, %v918
    %v1052 = vmul.f32 %v922, %v922
    %v1053 = vmul.f32 %v924, %v924
    %v1054 = vmul.f32 %v928, %v928
    %v1055 = vmul.f32 %v930, %v930
    %v1056 = vmul.f32 %v934, %v934
    %v1057 = vmul.f32 %v936, %v936
    %v1058 = vmul.f32 %v940, %v940
    %v1059 = vmul.f32 %v942, %v942
    %v1060 = vmul.f32 %v946, %v946
    %v1061 = vmul.f32 %v948, %v948
    %v1062 = vmul.f32 %v952, %v952
    %v1063 = vmul.f32 %v954, %v954
    %v1064 = vmul.f32 %v958, %v958
    %v1065 = vmul.f32 %v960, %v960
    %v1066 = vmul.f32 %v964, %v964
    %v1067 = vmul.f32 %v966, %v966
    %v1068 = vmul.f32 %v970, %v970
    %v1069 = vmul.f32 %v972, %v972
    %v1070 = vmul.f32 %v976, %v976
    %v1071 = vmul.f32 %v978, %v978
    %v1072 = vmul.f32 %v982, %v982
    %v1073 = vmul.f32 %v984, %v984
    %v1074 = vmul.f32 %v988, %v988
    %v1075 = vmul.f32 %v990, %v990
    %v1076 = vmul.f32 %v994, %v994
    %v1077 = vmul.f32 %v996, %v996
    %v1078 = vmul.f32 %v1000, %v1000
    %v1079 = vmul.f32 %v1002, %v1002
    %v1080 = vadd.f32 %v1048, %v1050
    %v1081 = vadd.f32 %v1080, %v1052
    %v1082 = vadd.f32 %v1081, %v1054
    %v1083 = vadd.f32 %v1082, %v1056
    %v1084 = vadd.f32 %v1083, %v1058
    %v1085 = vadd.f32 %v1084, %v1060
    %v1086 = vadd.f32 %v1085, %v1062
    %v1087 = vadd.f32 %v1086, %v1064
    %v1088 = vadd.f32 %v1087, %v1066
    %v1089 = vadd.f32 %v1088, %v1068
    %v1090 = vadd.f32 %v1089, %v1070
    %v1091 = vadd.f32 %v1090, %v1072
    %v1092 = vadd.f32 %v1091, %v1074
    %v1093 = vadd.f32 %v1092, %v1076
    %v1094 = vadd.f32 %v1093, %v1078
    %v1095 = vrot.slane %v1094, 4
    %v1096 = vadd.f32 %v1094, %v1095
    %v1097 = vrot.slane %v1096, 2
    %v1098 = vadd.f32 %v1096, %v1097
    %v1099 = vrot.slane %v1098, 1
    %v1100 = vadd.f32 %v1098, %v1099
    %v1101 = vadd.f32 %v1049, %v1051
    %v1102 = vadd.f32 %v1101, %v1053
    %v1103 = vadd.f32 %v1102, %v1055
    %v1104 = vadd.f32 %v1103, %v1057
    %v1105 = vadd.f32 %v1104, %v1059
    %v1106 = vadd.f32 %v1105, %v1061
    %v1107 = vadd.f32 %v1106, %v1063
    %v1108 = vadd.f32 %v1107, %v1065
    %v1109 = vadd.f32 %v1108, %v1067
    %v1110 = vadd.f32 %v1109, %v1069
    %v1111 = vadd.f32 %v1110, %v1071
    %v1112 = vadd.f32 %v1111, %v1073
    %v1113 = vadd.f32 %v1112, %v1075
    %v1114 = vadd.f32 %v1113, %v1077
    %v1115 = vadd.f32 %v1114, %v1079
    %v1116 = vrot.slane %v1115, 4
    %v1117 = vadd.f32 %v1115, %v1116
    %v1118 = vrot.slane %v1117, 2
    %v1119 = vadd.f32 %v1117, %v1118
    %v1120 = vrot.slane %v1119, 1
    %v1121 = vadd.f32 %v1119, %v1120
    %v1122 = vmul.f32 %v1026, 0.0078125
    %v1123 = vmul.f32 %v1047, 0.0078125
    %v1124 = vmul.f32 %v1100, 0.0078125
    %v1125 = vmul.f32 %v1121, 0.0078125
    %v1126 = vmul.f32 %v1122, %v1122
    %v1127 = vmul.f32 %v1123, %v1123
    %v1128 = vsub.f32 %v1124, %v1126
    %v1129 = vsub.f32 %v1125, %v1127
    %v1130 = vmax.f32 %v1128, 0.0
    %v1131 = vmax.f32 %v1129, 0.0
    %v1132 = vadd.f32 %v1130, 1e-05
    %v1133 = vadd.f32 %v1131, 1e-05
    %v1134 = vrsqrt.pop %v1132
    %v1135 = vrsqrt.pop %v1133
    %v1137 = vlaneseq
    %v1138 = vshrl.u32 %v1137, 7
    %v1139 = vsub.s32 0, %v1138
    %v1140 = vrot.slane %v1004, %v1139
    %v1141 = vlaneseq
    %v1142 = vshrl.u32 %v1141, 7
    %v1143 = vsub.s32 1, %v1142
    %v1144 = vrot.slane %v1004, %v1143
    %v1147 = vmul.f32 %v1134, %v1140
    %v1148 = vmul.f32 %v1135, %v1144
    %v1149 = vmul.f32 %v1122, %v1147
    %v1150 = vmul.f32 %v1123, %v1148
    %v1153 = vcombine.low %v1149, %v1150
    %v1155 = vunpack.c.l.s4 1966171168
    %v1156 = vunpack.c.0.s8 %v1155
    %v1157 = vlaneseq
    %v1158 = vshrl.u32 %v1157, 7
    %v1159 = vsub.s32 %v1156, %v1158
    %v1160 = vrot.slane %v1153, %v1159
    %v1162 = vunpack.c.l.s4 1966171168
    %v1163 = vunpack.c.0.s8 %v1162
    %v1164 = vlaneseq
    %v1165 = vshrl.u32 %v1164, 7
    %v1166 = vsub.s32 %v1163, %v1165
    %v1167 = vrot.slane %v1160, %v1166
    %v1169 = vsub.f32 %v1005, %v1167
    %v1170 = vlaneseq
    %v1171 = vshrl.u32 %v1170, 7
    %v1172 = vsub.s32 0, %v1171
    %v1173 = vrot.slane %v1147, %v1172
    %v1174 = vlaneseq
    %v1175 = vshrl.u32 %v1174, 7
    %v1176 = vsub.s32 0, %v1175
    %v1177 = vrot.slane %v1148, %v1176
    %v1178 = vmul.f32 %v910, %v1173
    %v1179 = vmul.f32 %v912, %v1177
    %v1180 = vmul.f32 %v916, %v1173
    %v1181 = vmul.f32 %v918, %v1177
    %v1182 = vmul.f32 %v922, %v1173
    %v1183 = vmul.f32 %v924, %v1177
    %v1184 = vmul.f32 %v928, %v1173
    %v1185 = vmul.f32 %v930, %v1177
    %v1186 = vmul.f32 %v934, %v1173
    %v1187 = vmul.f32 %v936, %v1177
    %v1188 = vmul.f32 %v940, %v1173
    %v1189 = vmul.f32 %v942, %v1177
    %v1190 = vmul.f32 %v946, %v1173
    %v1191 = vmul.f32 %v948, %v1177
    %v1192 = vmul.f32 %v952, %v1173
    %v1193 = vmul.f32 %v954, %v1177
    %v1194 = vmul.f32 %v958, %v1173
    %v1195 = vmul.f32 %v960, %v1177
    %v1196 = vmul.f32 %v964, %v1173
    %v1197 = vmul.f32 %v966, %v1177
    %v1198 = vmul.f32 %v970, %v1173
    %v1199 = vmul.f32 %v972, %v1177
    %v1200 = vmul.f32 %v976, %v1173
    %v1201 = vmul.f32 %v978, %v1177
    %v1202 = vmul.f32 %v982, %v1173
    %v1203 = vmul.f32 %v984, %v1177
    %v1204 = vmul.f32 %v988, %v1173
    %v1205 = vmul.f32 %v990, %v1177
    %v1206 = vmul.f32 %v994, %v1173
    %v1207 = vmul.f32 %v996, %v1177
    %v1208 = vmul.f32 %v1000, %v1173
    %v1209 = vmul.f32 %v1002, %v1177
    %v1211 = vlaneseq
    %v1212 = vshrl.u32 %v1211, 7
    %v1213 = vsub.s32 0, %v1212
    %v1214 = vrot.slane %v1169, %v1213
    %v1215 = vlaneseq
    %v1216 = vshrl.u32 %v1215, 7
    %v1217 = vsub.s32 1, %v1216
    %v1218 = vrot.slane %v1169, %v1217
    %v1221 = vadd.f32 %v1178, %v1214
    %v1222 = vadd.f32 %v1179, %v1218
    %v1223 = vadd.f32 %v1180, %v1214
    %v1224 = vadd.f32 %v1181, %v1218
    %v1225 = vadd.f32 %v1182, %v1214
    %v1226 = vadd.f32 %v1183, %v1218
    %v1227 = vadd.f32 %v1184, %v1214
    %v1228 = vadd.f32 %v1185, %v1218
    %v1229 = vadd.f32 %v1186, %v1214
    %v1230 = vadd.f32 %v1187, %v1218
    %v1231 = vadd.f32 %v1188, %v1214
    %v1232 = vadd.f32 %v1189, %v1218
    %v1233 = vadd.f32 %v1190, %v1214
    %v1234 = vadd.f32 %v1191, %v1218
    %v1235 = vadd.f32 %v1192, %v1214
    %v1236 = vadd.f32 %v1193, %v1218
    %v1237 = vadd.f32 %v1194, %v1214
    %v1238 = vadd.f32 %v1195, %v1218
    %v1239 = vadd.f32 %v1196, %v1214
    %v1240 = vadd.f32 %v1197, %v1218
    %v1241 = vadd.f32 %v1198, %v1214
    %v1242 = vadd.f32 %v1199, %v1218
    %v1243 = vadd.f32 %v1200, %v1214
    %v1244 = vadd.f32 %v1201, %v1218
    %v1245 = vadd.f32 %v1202, %v1214
    %v1246 = vadd.f32 %v1203, %v1218
    %v1247 = vadd.f32 %v1204, %v1214
    %v1248 = vadd.f32 %v1205, %v1218
    %v1249 = vadd.f32 %v1206, %v1214
    %v1250 = vadd.f32 %v1207, %v1218
    %v1251 = vadd.f32 %v1208, %v1214
    %v1252 = vadd.f32 %v1209, %v1218
    %v1253 = vmul.f32 %v1221, 0.5
    %v1254 = vmul.f32 %v1222, 0.5
    %v1255 = vmul.f32 %v1223, 0.5
    %v1256 = vmul.f32 %v1224, 0.5
    %v1257 = vmul.f32 %v1225, 0.5
    %v1258 = vmul.f32 %v1226, 0.5
    %v1259 = vmul.f32 %v1227, 0.5
    %v1260 = vmul.f32 %v1228, 0.5
    %v1261 = vmul.f32 %v1229, 0.5
    %v1262 = vmul.f32 %v1230, 0.5
    %v1263 = vmul.f32 %v1231, 0.5
    %v1264 = vmul.f32 %v1232, 0.5
    %v1265 = vmul.f32 %v1233, 0.5
    %v1266 = vmul.f32 %v1234, 0.5
    %v1267 = vmul.f32 %v1235, 0.5
    %v1268 = vmul.f32 %v1236, 0.5
    %v1269 = vmul.f32 %v1237, 0.5
    %v1270 = vmul.f32 %v1238, 0.5
    %v1271 = vmul.f32 %v1239, 0.5
    %v1272 = vmul.f32 %v1240, 0.5
    %v1273 = vmul.f32 %v1241, 0.5
    %v1274 = vmul.f32 %v1242, 0.5
    %v1275 = vmul.f32 %v1243, 0.5
    %v1276 = vmul.f32 %v1244, 0.5
    %v1277 = vmul.f32 %v1245, 0.5
    %v1278 = vmul.f32 %v1246, 0.5
    %v1279 = vmul.f32 %v1247, 0.5
    %v1280 = vmul.f32 %v1248, 0.5
    %v1281 = vmul.f32 %v1249, 0.5
    %v1282 = vmul.f32 %v1250, 0.5
    %v1283 = vmul.f32 %v1251, 0.5
    %v1284 = vmul.f32 %v1252, 0.5
    %v1285 = vtanh.pop %v1253
    %v1286 = vtanh.pop %v1254
    %v1287 = vtanh.pop %v1255
    %v1288 = vtanh.pop %v1256
    %v1289 = vtanh.pop %v1257
    %v1290 = vtanh.pop %v1258
    %v1291 = vtanh.pop %v1259
    %v1292 = vtanh.pop %v1260
    %v1293 = vtanh.pop %v1261
    %v1294 = vtanh.pop %v1262
    %v1295 = vtanh.pop %v1263
    %v1296 = vtanh.pop %v1264
    %v1297 = vtanh.pop %v1265
    %v1298 = vtanh.pop %v1266
    %v1299 = vtanh.pop %v1267
    %v1300 = vtanh.pop %v1268
    %v1301 = vtanh.pop %v1269
    %v1302 = vtanh.pop %v1270
    %v1303 = vtanh.pop %v1271
    %v1304 = vtanh.pop %v1272
    %v1305 = vtanh.pop %v1273
    %v1306 = vtanh.pop %v1274
    %v1307 = vtanh.pop %v1275
    %v1308 = vtanh.pop %v1276
    %v1309 = vtanh.pop %v1277
    %v1310 = vtanh.pop %v1278
    %v1311 = vtanh.pop %v1279
    %v1312 = vtanh.pop %v1280
    %v1313 = vtanh.pop %v1281
    %v1314 = vtanh.pop %v1282
    %v1315 = vtanh.pop %v1283
    %v1316 = vtanh.pop %v1284
    %v1317 = vmul.f32 %v1285, 0.5
    %v1318 = vmul.f32 %v1286, 0.5
    %v1319 = vmul.f32 %v1287, 0.5
    %v1320 = vmul.f32 %v1288, 0.5
    %v1321 = vmul.f32 %v1289, 0.5
    %v1322 = vmul.f32 %v1290, 0.5
    %v1323 = vmul.f32 %v1291, 0.5
    %v1324 = vmul.f32 %v1292, 0.5
    %v1325 = vmul.f32 %v1293, 0.5
    %v1326 = vmul.f32 %v1294, 0.5
    %v1327 = vmul.f32 %v1295, 0.5
    %v1328 = vmul.f32 %v1296, 0.5
    %v1329 = vmul.f32 %v1297, 0.5
    %v1330 = vmul.f32 %v1298, 0.5
    %v1331 = vmul.f32 %v1299, 0.5
    %v1332 = vmul.f32 %v1300, 0.5
    %v1333 = vmul.f32 %v1301, 0.5
    %v1334 = vmul.f32 %v1302, 0.5
    %v1335 = vmul.f32 %v1303, 0.5
    %v1336 = vmul.f32 %v1304, 0.5
    %v1337 = vmul.f32 %v1305, 0.5
    %v1338 = vmul.f32 %v1306, 0.5
    %v1339 = vmul.f32 %v1307, 0.5
    %v1340 = vmul.f32 %v1308, 0.5
    %v1341 = vmul.f32 %v1309, 0.5
    %v1342 = vmul.f32 %v1310, 0.5
    %v1343 = vmul.f32 %v1311, 0.5
    %v1344 = vmul.f32 %v1312, 0.5
    %v1345 = vmul.f32 %v1313, 0.5
    %v1346 = vmul.f32 %v1314, 0.5
    %v1347 = vmul.f32 %v1315, 0.5
    %v1348 = vmul.f32 %v1316, 0.5
    %v1349 = vadd.f32 %v1317, 0.5
    %v1350 = vadd.f32 %v1318, 0.5
    %v1351 = vadd.f32 %v1319, 0.5
    %v1352 = vadd.f32 %v1320, 0.5
    %v1353 = vadd.f32 %v1321, 0.5
    %v1354 = vadd.f32 %v1322, 0.5
    %v1355 = vadd.f32 %v1323, 0.5
    %v1356 = vadd.f32 %v1324, 0.5
    %v1357 = vadd.f32 %v1325, 0.5
    %v1358 = vadd.f32 %v1326, 0.5
    %v1359 = vadd.f32 %v1327, 0.5
    %v1360 = vadd.f32 %v1328, 0.5
    %v1361 = vadd.f32 %v1329, 0.5
    %v1362 = vadd.f32 %v1330, 0.5
    %v1363 = vadd.f32 %v1331, 0.5
    %v1364 = vadd.f32 %v1332, 0.5
    %v1365 = vadd.f32 %v1333, 0.5
    %v1366 = vadd.f32 %v1334, 0.5
    %v1367 = vadd.f32 %v1335, 0.5
    %v1368 = vadd.f32 %v1336, 0.5
    %v1369 = vadd.f32 %v1337, 0.5
    %v1370 = vadd.f32 %v1338, 0.5
    %v1371 = vadd.f32 %v1339, 0.5
    %v1372 = vadd.f32 %v1340, 0.5
    %v1373 = vadd.f32 %v1341, 0.5
    %v1374 = vadd.f32 %v1342, 0.5
    %v1375 = vadd.f32 %v1343, 0.5
    %v1376 = vadd.f32 %v1344, 0.5
    %v1377 = vadd.f32 %v1345, 0.5
    %v1378 = vadd.f32 %v1346, 0.5
    %v1379 = vadd.f32 %v1347, 0.5
    %v1380 = vadd.f32 %v1348, 0.5
    %v1381 = vld [vmem:[#allocation4] sm:$0xff]
    %v1382 = vld [vmem:[#allocation4 + $0x8] sm:$0xff]
    %v1383 = vld [vmem:[#allocation4 + $0x10] sm:$0xff]
    %v1384 = vld [vmem:[#allocation4 + $0x18] sm:$0xff]
    %v1385 = vld [vmem:[#allocation4 + $0x20] sm:$0xff]
    %v1386 = vld [vmem:[#allocation4 + $0x28] sm:$0xff]
    %v1387 = vld [vmem:[#allocation4 + $0x30] sm:$0xff]
    %v1388 = vld [vmem:[#allocation4 + $0x38] sm:$0xff]
    %v1389 = vld [vmem:[#allocation4 + $0x40] sm:$0xff]
    %v1390 = vld [vmem:[#allocation4 + $0x48] sm:$0xff]
    %v1391 = vld [vmem:[#allocation4 + $0x50] sm:$0xff]
    %v1392 = vld [vmem:[#allocation4 + $0x58] sm:$0xff]
    %v1393 = vld [vmem:[#allocation4 + $0x60] sm:$0xff]
    %v1394 = vld [vmem:[#allocation4 + $0x68] sm:$0xff]
    %v1395 = vld [vmem:[#allocation4 + $0x70] sm:$0xff]
    %v1396 = vld [vmem:[#allocation4 + $0x78] sm:$0xff]
    %v1397 = vld [vmem:[#allocation4 + $0x80] sm:$0xff]
    %v1398 = vld [vmem:[#allocation4 + $0x88] sm:$0xff]
    %v1399 = vld [vmem:[#allocation4 + $0x90] sm:$0xff]
    %v1400 = vld [vmem:[#allocation4 + $0x98] sm:$0xff]
    %v1401 = vld [vmem:[#allocation4 + $0xa0] sm:$0xff]
    %v1402 = vld [vmem:[#allocation4 + $0xa8] sm:$0xff]
    %v1403 = vld [vmem:[#allocation4 + $0xb0] sm:$0xff]
    %v1404 = vld [vmem:[#allocation4 + $0xb8] sm:$0xff]
    %v1405 = vld [vmem:[#allocation4 + $0xc0] sm:$0xff]
    %v1406 = vld [vmem:[#allocation4 + $0xc8] sm:$0xff]
    %v1407 = vld [vmem:[#allocation4 + $0xd0] sm:$0xff]
    %v1408 = vld [vmem:[#allocation4 + $0xd8] sm:$0xff]
    %v1409 = vld [vmem:[#allocation4 + $0xe0] sm:$0xff]
    %v1410 = vld [vmem:[#allocation4 + $0xe8] sm:$0xff]
    %v1411 = vld [vmem:[#allocation4 + $0xf0] sm:$0xff]
    %v1412 = vld [vmem:[#allocation4 + $0xf8] sm:$0xff]
    %1413 = vmatprep.subr.mxu0 0.0
    %1414 = vmatpush1.msra.mxu0 %v1381
    %1415 = vmatprep.subr.mxu0 0.0
    %1416 = vmatpush1.msra.mxu0 %v1382
    %1417 = vmatprep.subr.mxu0 0.0
    %1418 = vmatpush1.msra.mxu0 %v1383
    %1419 = vmatprep.subr.mxu0 0.0
    %1420 = vmatpush1.msra.mxu0 %v1384
    %1421 = vmatprep.subr.mxu0 0.0
    %1422 = vmatpush1.msra.mxu0 %v1385
    %1423 = vmatprep.subr.mxu0 0.0
    %1424 = vmatpush1.msra.mxu0 %v1386
    %1425 = vmatprep.subr.mxu0 0.0
    %1426 = vmatpush1.msra.mxu0 %v1387
    %1427 = vmatprep.subr.mxu0 0.0
    %1428 = vmatpush1.msra.mxu0 %v1388
    %1429 = vmatprep.subr.mxu0 0.0
    %1430 = vmatpush1.msra.mxu0 %v1389
    %1431 = vmatprep.subr.mxu0 0.0
    %1432 = vmatpush1.msra.mxu0 %v1390
    %1433 = vmatprep.subr.mxu0 0.0
    %1434 = vmatpush1.msra.mxu0 %v1391
    %1435 = vmatprep.subr.mxu0 0.0
    %1436 = vmatpush1.msra.mxu0 %v1392
    %1437 = vmatprep.subr.mxu0 0.0
    %1438 = vmatpush1.msra.mxu0 %v1393
    %1439 = vmatprep.subr.mxu0 0.0
    %1440 = vmatpush1.msra.mxu0 %v1394
    %1441 = vmatprep.subr.mxu0 0.0
    %1442 = vmatpush1.msra.mxu0 %v1395
    %1443 = vmatprep.subr.mxu0 0.0
    %1444 = vmatpush1.msra.mxu0 %v1396
    %1445 = vmatprep.subr.mxu0 0.0
    %1446 = vmatpush1.msra.mxu0 %v1397
    %1447 = vmatprep.subr.mxu0 0.0
    %1448 = vmatpush1.msra.mxu0 %v1398
    %1449 = vmatprep.subr.mxu0 0.0
    %1450 = vmatpush1.msra.mxu0 %v1399
    %1451 = vmatprep.subr.mxu0 0.0
    %1452 = vmatpush1.msra.mxu0 %v1400
    %1453 = vmatprep.subr.mxu0 0.0
    %1454 = vmatpush1.msra.mxu0 %v1401
    %1455 = vmatprep.subr.mxu0 0.0
    %1456 = vmatpush1.msra.mxu0 %v1402
    %1457 = vmatprep.subr.mxu0 0.0
    %1458 = vmatpush1.msra.mxu0 %v1403
    %1459 = vmatprep.subr.mxu0 0.0
    %1460 = vmatpush1.msra.mxu0 %v1404
    %1461 = vmatprep.subr.mxu0 0.0
    %1462 = vmatpush1.msra.mxu0 %v1405
    %1463 = vmatprep.subr.mxu0 0.0
    %1464 = vmatpush1.msra.mxu0 %v1406
    %1465 = vmatprep.subr.mxu0 0.0
    %1466 = vmatpush1.msra.mxu0 %v1407
    %1467 = vmatprep.subr.mxu0 0.0
    %1468 = vmatpush1.msra.mxu0 %v1408
    %1469 = vmatprep.subr.mxu0 0.0
    %1470 = vmatpush1.msra.mxu0 %v1409
    %1471 = vmatprep.subr.mxu0 0.0
    %1472 = vmatpush1.msra.mxu0 %v1410
    %1473 = vmatprep.subr.mxu0 0.0
    %1474 = vmatpush1.msra.mxu0 %v1411
    %1475 = vmatprep.subr.mxu0 0.0
    %1476 = vmatpush1.msra.mxu0 %v1412
    %1477 = vmatprep.mubr.f32.mxu0 %v1350
    %1478 = vmatmul.mubr.f32.gmra.mrb[0].mxu0 %v1349
    %v1479 = vpop.f32.mrb[0].mxu0
    %v1480 = vadd.f32 0.0, %v1479
    %v1481 = vpop.f32.mrb[0].mxu0
    %1482 = vmatprep.mubr.f32.mxu0 %v1352
    %1483 = vmatmul.mubr.f32.gmra.mrb[0].mxu0 %v1351
    %v1484 = vpop.f32.mrb[0].mxu0
    %v1485 = vadd.f32 0.0, %v1484
    %v1486 = vpop.f32.mrb[0].mxu0
    %1487 = vmatprep.mubr.f32.mxu0 %v1354
    %1488 = vmatmul.mubr.f32.gmra.mrb[0].mxu0 %v1353
    %v1489 = vpop.f32.mrb[0].mxu0
    %v1490 = vadd.f32 0.0, %v1489
    %v1491 = vpop.f32.mrb[0].mxu0
    %1492 = vmatprep.mubr.f32.mxu0 %v1356
    %1493 = vmatmul.mubr.f32.gmra.mrb[0].mxu0 %v1355
    %v1494 = vpop.f32.mrb[0].mxu0
    %v1495 = vadd.f32 0.0, %v1494
    %v1496 = vpop.f32.mrb[0].mxu0
    %1497 = vmatprep.mubr.f32.mxu0 %v1358
    %1498 = vmatmul.mubr.f32.gmra.mrb[0].mxu0 %v1357
    %v1499 = vpop.f32.mrb[0].mxu0
    %v1500 = vadd.f32 0.0, %v1499
    %v1501 = vpop.f32.mrb[0].mxu0
    %1502 = vmatprep.mubr.f32.mxu0 %v1360
    %1503 = vmatmul.mubr.f32.gmra.mrb[0].mxu0 %v1359
    %v1504 = vpop.f32.mrb[0].mxu0
    %v1505 = vadd.f32 0.0, %v1504
    %v1506 = vpop.f32.mrb[0].mxu0
    %1507 = vmatprep.mubr.f32.mxu0 %v1362
    %1508 = vmatmul.mubr.f32.gmra.mrb[0].mxu0 %v1361
    %v1509 = vpop.f32.mrb[0].mxu0
    %v1510 = vadd.f32 0.0, %v1509
    %v1511 = vpop.f32.mrb[0].mxu0
    %1512 = vmatprep.mubr.f32.mxu0 %v1364
    %1513 = vmatmul.mubr.f32.gmra.mrb[0].mxu0 %v1363
    %v1514 = vpop.f32.mrb[0].mxu0
    %v1515 = vadd.f32 0.0, %v1514
    %v1516 = vpop.f32.mrb[0].mxu0
    %1517 = vmatprep.mubr.f32.mxu0 %v1366
    %1518 = vmatmul.mubr.f32.gmra.mrb[0].mxu0 %v1365
    %v1519 = vpop.f32.mrb[0].mxu0
    %v1520 = vadd.f32 0.0, %v1519
    %v1521 = vpop.f32.mrb[0].mxu0
    %1522 = vmatprep.mubr.f32.mxu0 %v1368
    %1523 = vmatmul.mubr.f32.gmra.mrb[0].mxu0 %v1367
    %v1524 = vpop.f32.mrb[0].mxu0
    %v1525 = vadd.f32 0.0, %v1524
    %v1526 = vpop.f32.mrb[0].mxu0
    %1527 = vmatprep.mubr.f32.mxu0 %v1370
    %1528 = vmatmul.mubr.f32.gmra.mrb[0].mxu0 %v1369
    %v1529 = vpop.f32.mrb[0].mxu0
    %v1530 = vadd.f32 0.0, %v1529
    %v1531 = vpop.f32.mrb[0].mxu0
    %1532 = vmatprep.mubr.f32.mxu0 %v1372
    %1533 = vmatmul.mubr.f32.gmra.mrb[0].mxu0 %v1371
    %v1534 = vpop.f32.mrb[0].mxu0
    %v1535 = vadd.f32 0.0, %v1534
    %v1536 = vpop.f32.mrb[0].mxu0
    %1537 = vmatprep.mubr.f32.mxu0 %v1374
    %1538 = vmatmul.mubr.f32.gmra.mrb[0].mxu0 %v1373
    %v1539 = vpop.f32.mrb[0].mxu0
    %v1540 = vadd.f32 0.0, %v1539
    %v1541 = vpop.f32.mrb[0].mxu0
    %1542 = vmatprep.mubr.f32.mxu0 %v1376
    %1543 = vmatmul.mubr.f32.gmra.mrb[0].mxu0 %v1375
    %v1544 = vpop.f32.mrb[0].mxu0
    %v1545 = vadd.f32 0.0, %v1544
    %v1546 = vpop.f32.mrb[0].mxu0
    %1547 = vmatprep.mubr.f32.mxu0 %v1378
    %1548 = vmatmul.mubr.f32.gmra.mrb[0].mxu0 %v1377
    %v1549 = vpop.f32.mrb[0].mxu0
    %v1550 = vadd.f32 0.0, %v1549
    %v1551 = vpop.f32.mrb[0].mxu0
    %1552 = vmatprep.mubr.f32.mxu0 %v1380
    %1553 = vmatmul.mubr.f32.gmra.mrb[0].mxu0 %v1379
    %v1554 = vpop.f32.mrb[0].mxu0
    %v1555 = vadd.f32 0.0, %v1554
    %v1556 = vpop.f32.mrb[0].mxu0
    %1557 = vdwg.mxu0
    %v1558 = vld [vmem:[%s7 + $0x8] sm:$0x1]
    %v1559 = vld [vmem:[%s7 + $0x9] sm:$0x1]
    %v1560 = vadd.f32 %v1480, %v1485
    %v1561 = vadd.f32 %v1560, %v1490
    %v1562 = vadd.f32 %v1561, %v1495
    %v1563 = vadd.f32 %v1562, %v1500
    %v1564 = vadd.f32 %v1563, %v1505
    %v1565 = vadd.f32 %v1564, %v1510
    %v1566 = vadd.f32 %v1565, %v1515
    %v1567 = vadd.f32 %v1566, %v1520
    %v1568 = vadd.f32 %v1567, %v1525
    %v1569 = vadd.f32 %v1568, %v1530
    %v1570 = vadd.f32 %v1569, %v1535
    %v1571 = vadd.f32 %v1570, %v1540
    %v1572 = vadd.f32 %v1571, %v1545
    %v1573 = vadd.f32 %v1572, %v1550
    %v1574 = vadd.f32 %v1573, %v1555
    %v1575 = vrot.slane %v1574, 4
    %v1576 = vadd.f32 %v1574, %v1575
    %v1577 = vrot.slane %v1576, 2
    %v1578 = vadd.f32 %v1576, %v1577
    %v1579 = vrot.slane %v1578, 1
    %v1580 = vadd.f32 %v1578, %v1579
    %v1581 = vmul.f32 %v1480, %v1480
    %v1582 = vmul.f32 %v1485, %v1485
    %v1583 = vmul.f32 %v1490, %v1490
    %v1584 = vmul.f32 %v1495, %v1495
    %v1585 = vmul.f32 %v1500, %v1500
    %v1586 = vmul.f32 %v1505, %v1505
    %v1587 = vmul.f32 %v1510, %v1510
    %v1588 = vmul.f32 %v1515, %v1515
    %v1589 = vmul.f32 %v1520, %v1520
    %v1590 = vmul.f32 %v1525, %v1525
    %v1591 = vmul.f32 %v1530, %v1530
    %v1592 = vmul.f32 %v1535, %v1535
    %v1593 = vmul.f32 %v1540, %v1540
    %v1594 = vmul.f32 %v1545, %v1545
    %v1595 = vmul.f32 %v1550, %v1550
    %v1596 = vmul.f32 %v1555, %v1555
    %v1597 = vadd.f32 %v1581, %v1582
    %v1598 = vadd.f32 %v1597, %v1583
    %v1599 = vadd.f32 %v1598, %v1584
    %v1600 = vadd.f32 %v1599, %v1585
    %v1601 = vadd.f32 %v1600, %v1586
    %v1602 = vadd.f32 %v1601, %v1587
    %v1603 = vadd.f32 %v1602, %v1588
    %v1604 = vadd.f32 %v1603, %v1589
    %v1605 = vadd.f32 %v1604, %v1590
    %v1606 = vadd.f32 %v1605, %v1591
    %v1607 = vadd.f32 %v1606, %v1592
    %v1608 = vadd.f32 %v1607, %v1593
    %v1609 = vadd.f32 %v1608, %v1594
    %v1610 = vadd.f32 %v1609, %v1595
    %v1611 = vadd.f32 %v1610, %v1596
    %v1612 = vrot.slane %v1611, 4
    %v1613 = vadd.f32 %v1611, %v1612
    %v1614 = vrot.slane %v1613, 2
    %v1615 = vadd.f32 %v1613, %v1614
    %v1616 = vrot.slane %v1615, 1
    %v1617 = vadd.f32 %v1615, %v1616
    %v1618 = vmul.f32 %v1580, 0.0078125
    %v1619 = vmul.f32 %v1617, 0.0078125
    %v1620 = vmul.f32 %v1618, %v1618
    %v1621 = vsub.f32 %v1619, %v1620
    %v1622 = vmax.f32 %v1621, 0.0
    %v1623 = vadd.f32 %v1622, 1e-05
    %v1624 = vrsqrt.pop %v1623
    %v1625 = vmul.f32 %v1624, %v1558
    %v1626 = vmul.f32 %v1618, %v1625
    %v1627 = vsub.f32 %v1559, %v1626
    %v1628 = vlaneseq
    %v1629 = vshrl.u32 %v1628, 7
    %v1630 = vsub.s32 0, %v1629
    %v1631 = vrot.slane %v1625, %v1630
    %v1632 = vmul.f32 %v1480, %v1631
    %v1633 = vmul.f32 %v1485, %v1631
    %v1634 = vmul.f32 %v1490, %v1631
    %v1635 = vmul.f32 %v1495, %v1631
    %v1636 = vmul.f32 %v1500, %v1631
    %v1637 = vmul.f32 %v1505, %v1631
    %v1638 = vmul.f32 %v1510, %v1631
    %v1639 = vmul.f32 %v1515, %v1631
    %v1640 = vmul.f32 %v1520, %v1631
    %v1641 = vmul.f32 %v1525, %v1631
    %v1642 = vmul.f32 %v1530, %v1631
    %v1643 = vmul.f32 %v1535, %v1631
    %v1644 = vmul.f32 %v1540, %v1631
    %v1645 = vmul.f32 %v1545, %v1631
    %v1646 = vmul.f32 %v1550, %v1631
    %v1647 = vmul.f32 %v1555, %v1631
    %v1649 = vlaneseq
    %v1650 = vshrl.u32 %v1649, 7
    %v1651 = vsub.s32 0, %v1650
    %v1652 = vrot.slane %v1627, %v1651
    %v1654 = vadd.f32 %v1632, %v1652
    %v1655 = vadd.f32 %v1633, %v1652
    %v1656 = vadd.f32 %v1634, %v1652
    %v1657 = vadd.f32 %v1635, %v1652
    %v1658 = vadd.f32 %v1636, %v1652
    %v1659 = vadd.f32 %v1637, %v1652
    %v1660 = vadd.f32 %v1638, %v1652
    %v1661 = vadd.f32 %v1639, %v1652
    %v1662 = vadd.f32 %v1640, %v1652
    %v1663 = vadd.f32 %v1641, %v1652
    %v1664 = vadd.f32 %v1642, %v1652
    %v1665 = vadd.f32 %v1643, %v1652
    %v1666 = vadd.f32 %v1644, %v1652
    %v1667 = vadd.f32 %v1645, %v1652
    %v1668 = vadd.f32 %v1646, %v1652
    %v1669 = vadd.f32 %v1647, %v1652
    %v1670 = vmul.f32 %v1654, 0.5
    %v1671 = vmul.f32 %v1655, 0.5
    %v1672 = vmul.f32 %v1656, 0.5
    %v1673 = vmul.f32 %v1657, 0.5
    %v1674 = vmul.f32 %v1658, 0.5
    %v1675 = vmul.f32 %v1659, 0.5
    %v1676 = vmul.f32 %v1660, 0.5
    %v1677 = vmul.f32 %v1661, 0.5
    %v1678 = vmul.f32 %v1662, 0.5
    %v1679 = vmul.f32 %v1663, 0.5
    %v1680 = vmul.f32 %v1664, 0.5
    %v1681 = vmul.f32 %v1665, 0.5
    %v1682 = vmul.f32 %v1666, 0.5
    %v1683 = vmul.f32 %v1667, 0.5
    %v1684 = vmul.f32 %v1668, 0.5
    %v1685 = vmul.f32 %v1669, 0.5
    %v1686 = vtanh.pop %v1670
    %v1687 = vtanh.pop %v1671
    %v1688 = vtanh.pop %v1672
    %v1689 = vtanh.pop %v1673
    %v1690 = vtanh.pop %v1674
    %v1691 = vtanh.pop %v1675
    %v1692 = vtanh.pop %v1676
    %v1693 = vtanh.pop %v1677
    %v1694 = vtanh.pop %v1678
    %v1695 = vtanh.pop %v1679
    %v1696 = vtanh.pop %v1680
    %v1697 = vtanh.pop %v1681
    %v1698 = vtanh.pop %v1682
    %v1699 = vtanh.pop %v1683
    %v1700 = vtanh.pop %v1684
    %v1701 = vtanh.pop %v1685
    %v1702 = vmul.f32 %v1686, 0.5
    %v1703 = vmul.f32 %v1687, 0.5
    %v1704 = vmul.f32 %v1688, 0.5
    %v1705 = vmul.f32 %v1689, 0.5
    %v1706 = vmul.f32 %v1690, 0.5
    %v1707 = vmul.f32 %v1691, 0.5
    %v1708 = vmul.f32 %v1692, 0.5
    %v1709 = vmul.f32 %v1693, 0.5
    %v1710 = vmul.f32 %v1694, 0.5
    %v1711 = vmul.f32 %v1695, 0.5
    %v1712 = vmul.f32 %v1696, 0.5
    %v1713 = vmul.f32 %v1697, 0.5
    %v1714 = vmul.f32 %v1698, 0.5
    %v1715 = vmul.f32 %v1699, 0.5
    %v1716 = vmul.f32 %v1700, 0.5
    %v1717 = vmul.f32 %v1701, 0.5
    %v1718 = vadd.f32 %v1702, 0.5
    %v1719 = vadd.f32 %v1703, 0.5
    %v1720 = vadd.f32 %v1704, 0.5
    %v1721 = vadd.f32 %v1705, 0.5
    %v1722 = vadd.f32 %v1706, 0.5
    %v1723 = vadd.f32 %v1707, 0.5
    %v1724 = vadd.f32 %v1708, 0.5
    %v1725 = vadd.f32 %v1709, 0.5
    %v1726 = vadd.f32 %v1710, 0.5
    %v1727 = vadd.f32 %v1711, 0.5
    %v1728 = vadd.f32 %v1712, 0.5
    %v1729 = vadd.f32 %v1713, 0.5
    %v1730 = vadd.f32 %v1714, 0.5
    %v1731 = vadd.f32 %v1715, 0.5
    %v1732 = vadd.f32 %v1716, 0.5
    %v1733 = vadd.f32 %v1717, 0.5
    %v1734 = vld [vmem:[#allocation6] sm:$0xff]
    %v1735 = vld [vmem:[#allocation6 + $0x8] sm:$0xff]
    %v1736 = vld [vmem:[#allocation6 + $0x10] sm:$0xff]
    %v1737 = vld [vmem:[#allocation6 + $0x18] sm:$0xff]
    %v1738 = vld [vmem:[#allocation6 + $0x20] sm:$0xff]
    %v1739 = vld [vmem:[#allocation6 + $0x28] sm:$0xff]
    %v1740 = vld [vmem:[#allocation6 + $0x30] sm:$0xff]
    %v1741 = vld [vmem:[#allocation6 + $0x38] sm:$0xff]
    %v1742 = vld [vmem:[#allocation6 + $0x40] sm:$0xff]
    %v1743 = vld [vmem:[#allocation6 + $0x48] sm:$0xff]
    %v1744 = vld [vmem:[#allocation6 + $0x50] sm:$0xff]
    %v1745 = vld [vmem:[#allocation6 + $0x58] sm:$0xff]
    %v1746 = vld [vmem:[#allocation6 + $0x60] sm:$0xff]
    %v1747 = vld [vmem:[#allocation6 + $0x68] sm:$0xff]
    %v1748 = vld [vmem:[#allocation6 + $0x70] sm:$0xff]
    %v1749 = vld [vmem:[#allocation6 + $0x78] sm:$0xff]
    %1750 = vmatprep.subr.mxu0 0.0
    %1751 = vmatpush1.msra.mxu0 %v1734
    %1752 = vmatprep.subr.mxu0 0.0
    %1753 = vmatpush1.msra.mxu0 %v1735
    %1754 = vmatprep.subr.mxu0 0.0
    %1755 = vmatpush1.msra.mxu0 %v1736
    %1756 = vmatprep.subr.mxu0 0.0
    %1757 = vmatpush1.msra.mxu0 %v1737
    %1758 = vmatprep.subr.mxu0 0.0
    %1759 = vmatpush1.msra.mxu0 %v1738
    %1760 = vmatprep.subr.mxu0 0.0
    %1761 = vmatpush1.msra.mxu0 %v1739
    %1762 = vmatprep.subr.mxu0 0.0
    %1763 = vmatpush1.msra.mxu0 %v1740
    %1764 = vmatprep.subr.mxu0 0.0
    %1765 = vmatpush1.msra.mxu0 %v1741
    %1766 = vmatprep.subr.mxu0 0.0
    %1767 = vmatpush1.msra.mxu0 %v1742
    %1768 = vmatprep.subr.mxu0 0.0
    %1769 = vmatpush1.msra.mxu0 %v1743
    %1770 = vmatprep.subr.mxu0 0.0
    %1771 = vmatpush1.msra.mxu0 %v1744
    %1772 = vmatprep.subr.mxu0 0.0
    %1773 = vmatpush1.msra.mxu0 %v1745
    %1774 = vmatprep.subr.mxu0 0.0
    %1775 = vmatpush1.msra.mxu0 %v1746
    %1776 = vmatprep.subr.mxu0 0.0
    %1777 = vmatpush1.msra.mxu0 %v1747
    %1778 = vmatprep.subr.mxu0 0.0
    %1779 = vmatpush1.msra.mxu0 %v1748
    %1780 = vmatprep.subr.mxu0 0.0
    %1781 = vmatpush1.msra.mxu0 %v1749
    %1782 = vmatprep.subr.mxu0 0.0
    %1783 = vmatpush1.msra.mxu0 0.0
    %1784 = vmatprep.subr.mxu0 0.0
    %1785 = vmatpush1.msra.mxu0 0.0
    %1786 = vmatprep.subr.mxu0 0.0
    %1787 = vmatpush1.msra.mxu0 0.0
    %1788 = vmatprep.subr.mxu0 0.0
    %1789 = vmatpush1.msra.mxu0 0.0
    %1790 = vmatprep.subr.mxu0 0.0
    %1791 = vmatpush1.msra.mxu0 0.0
    %1792 = vmatprep.subr.mxu0 0.0
    %1793 = vmatpush1.msra.mxu0 0.0
    %1794 = vmatprep.subr.mxu0 0.0
    %1795 = vmatpush1.msra.mxu0 0.0
    %1796 = vmatprep.subr.mxu0 0.0
    %1797 = vmatpush1.msra.mxu0 0.0
    %1798 = vmatprep.subr.mxu0 0.0
    %1799 = vmatpush1.msra.mxu0 0.0
    %1800 = vmatprep.subr.mxu0 0.0
    %1801 = vmatpush1.msra.mxu0 0.0
    %1802 = vmatprep.subr.mxu0 0.0
    %1803 = vmatpush1.msra.mxu0 0.0
    %1804 = vmatprep.subr.mxu0 0.0
    %1805 = vmatpush1.msra.mxu0 0.0
    %1806 = vmatprep.subr.mxu0 0.0
    %1807 = vmatpush1.msra.mxu0 0.0
    %1808 = vmatprep.subr.mxu0 0.0
    %1809 = vmatpush1.msra.mxu0 0.0
    %1810 = vmatprep.subr.mxu0 0.0
    %1811 = vmatpush1.msra.mxu0 0.0
    %1812 = vmatprep.subr.mxu0 0.0
    %1813 = vmatpush1.msra.mxu0 0.0
    %1814 = vmatprep.mubr.f32.mxu0 0.0
    %1815 = vmatmul.mubr.f32.gmra.mrb[0].mxu0 %v1718
    %v1816 = vpop.f32.mrb[0].mxu0
    %v1817 = vadd.f32 0.0, %v1816
    %v1818 = vpop.f32.mrb[0].mxu0
    %1819 = vmatprep.mubr.f32.mxu0 0.0
    %1820 = vmatmul.mubr.f32.gmra.mrb[0].mxu0 %v1719
    %v1821 = vpop.f32.mrb[0].mxu0
    %v1822 = vadd.f32 0.0, %v1821
    %v1823 = vpop.f32.mrb[0].mxu0
    %1824 = vmatprep.mubr.f32.mxu0 0.0
    %1825 = vmatmul.mubr.f32.gmra.mrb[0].mxu0 %v1720
    %v1826 = vpop.f32.mrb[0].mxu0
    %v1827 = vadd.f32 0.0, %v1826
    %v1828 = vpop.f32.mrb[0].mxu0
    %1829 = vmatprep.mubr.f32.mxu0 0.0
    %1830 = vmatmul.mubr.f32.gmra.mrb[0].mxu0 %v1721
    %v1831 = vpop.f32.mrb[0].mxu0
    %v1832 = vadd.f32 0.0, %v1831
    %v1833 = vpop.f32.mrb[0].mxu0
    %1834 = vmatprep.mubr.f32.mxu0 0.0
    %1835 = vmatmul.mubr.f32.gmra.mrb[0].mxu0 %v1722
    %v1836 = vpop.f32.mrb[0].mxu0
    %v1837 = vadd.f32 0.0, %v1836
    %v1838 = vpop.f32.mrb[0].mxu0
    %1839 = vmatprep.mubr.f32.mxu0 0.0
    %1840 = vmatmul.mubr.f32.gmra.mrb[0].mxu0 %v1723
    %v1841 = vpop.f32.mrb[0].mxu0
    %v1842 = vadd.f32 0.0, %v1841
    %v1843 = vpop.f32.mrb[0].mxu0
    %1844 = vmatprep.mubr.f32.mxu0 0.0
    %1845 = vmatmul.mubr.f32.gmra.mrb[0].mxu0 %v1724
    %v1846 = vpop.f32.mrb[0].mxu0
    %v1847 = vadd.f32 0.0, %v1846
    %v1848 = vpop.f32.mrb[0].mxu0
    %1849 = vmatprep.mubr.f32.mxu0 0.0
    %1850 = vmatmul.mubr.f32.gmra.mrb[0].mxu0 %v1725
    %v1851 = vpop.f32.mrb[0].mxu0
    %v1852 = vadd.f32 0.0, %v1851
    %v1853 = vpop.f32.mrb[0].mxu0
    %1854 = vmatprep.mubr.f32.mxu0 0.0
    %1855 = vmatmul.mubr.f32.gmra.mrb[0].mxu0 %v1726
    %v1856 = vpop.f32.mrb[0].mxu0
    %v1857 = vadd.f32 0.0, %v1856
    %v1858 = vpop.f32.mrb[0].mxu0
    %1859 = vmatprep.mubr.f32.mxu0 0.0
    %1860 = vmatmul.mubr.f32.gmra.mrb[0].mxu0 %v1727
    %v1861 = vpop.f32.mrb[0].mxu0
    %v1862 = vadd.f32 0.0, %v1861
    %v1863 = vpop.f32.mrb[0].mxu0
    %1864 = vmatprep.mubr.f32.mxu0 0.0
    %1865 = vmatmul.mubr.f32.gmra.mrb[0].mxu0 %v1728
    %v1866 = vpop.f32.mrb[0].mxu0
    %v1867 = vadd.f32 0.0, %v1866
    %v1868 = vpop.f32.mrb[0].mxu0
    %1869 = vmatprep.mubr.f32.mxu0 0.0
    %1870 = vmatmul.mubr.f32.gmra.mrb[0].mxu0 %v1729
    %v1871 = vpop.f32.mrb[0].mxu0
    %v1872 = vadd.f32 0.0, %v1871
    %v1873 = vpop.f32.mrb[0].mxu0
    %1874 = vmatprep.mubr.f32.mxu0 0.0
    %1875 = vmatmul.mubr.f32.gmra.mrb[0].mxu0 %v1730
    %v1876 = vpop.f32.mrb[0].mxu0
    %v1877 = vadd.f32 0.0, %v1876
    %v1878 = vpop.f32.mrb[0].mxu0
    %1879 = vmatprep.mubr.f32.mxu0 0.0
    %1880 = vmatmul.mubr.f32.gmra.mrb[0].mxu0 %v1731
    %v1881 = vpop.f32.mrb[0].mxu0
    %v1882 = vadd.f32 0.0, %v1881
    %v1883 = vpop.f32.mrb[0].mxu0
    %1884 = vmatprep.mubr.f32.mxu0 0.0
    %1885 = vmatmul.mubr.f32.gmra.mrb[0].mxu0 %v1732
    %v1886 = vpop.f32.mrb[0].mxu0
    %v1887 = vadd.f32 0.0, %v1886
    %v1888 = vpop.f32.mrb[0].mxu0
    %1889 = vmatprep.mubr.f32.mxu0 0.0
    %1890 = vmatmul.mubr.f32.gmra.mrb[0].mxu0 %v1733
    %v1891 = vpop.f32.mrb[0].mxu0
    %v1892 = vadd.f32 0.0, %v1891
    %v1893 = vpop.f32.mrb[0].mxu0
    %1894 = vdwg.mxu0
    %v1895 = vld [vmem:[%s7 + $0xa] sm:$0x1]
    %v1896 = vld [vmem:[%s7 + $0xb] sm:$0x1]
    %v1897 = vadd.f32 %v1817, %v1822
    %v1898 = vadd.f32 %v1897, %v1827
    %v1899 = vadd.f32 %v1898, %v1832
    %v1900 = vadd.f32 %v1899, %v1837
    %v1901 = vadd.f32 %v1900, %v1842
    %v1902 = vadd.f32 %v1901, %v1847
    %v1903 = vadd.f32 %v1902, %v1852
    %v1904 = vadd.f32 %v1903, %v1857
    %v1905 = vadd.f32 %v1904, %v1862
    %v1906 = vadd.f32 %v1905, %v1867
    %v1907 = vadd.f32 %v1906, %v1872
    %v1908 = vadd.f32 %v1907, %v1877
    %v1909 = vadd.f32 %v1908, %v1882
    %v1910 = vadd.f32 %v1909, %v1887
    %v1911 = vadd.f32 %v1910, %v1892
    %v1912 = vrot.slane %v1911, 4
    %v1913 = vadd.f32 %v1911, %v1912
    %v1914 = vrot.slane %v1913, 2
    %v1915 = vadd.f32 %v1913, %v1914
    %v1916 = vrot.slane %v1915, 1
    %v1917 = vadd.f32 %v1915, %v1916
    %v1918 = vmul.f32 %v1817, %v1817
    %v1919 = vmul.f32 %v1822, %v1822
    %v1920 = vmul.f32 %v1827, %v1827
    %v1921 = vmul.f32 %v1832, %v1832
    %v1922 = vmul.f32 %v1837, %v1837
    %v1923 = vmul.f32 %v1842, %v1842
    %v1924 = vmul.f32 %v1847, %v1847
    %v1925 = vmul.f32 %v1852, %v1852
    %v1926 = vmul.f32 %v1857, %v1857
    %v1927 = vmul.f32 %v1862, %v1862
    %v1928 = vmul.f32 %v1867, %v1867
    %v1929 = vmul.f32 %v1872, %v1872
    %v1930 = vmul.f32 %v1877, %v1877
    %v1931 = vmul.f32 %v1882, %v1882
    %v1932 = vmul.f32 %v1887, %v1887
    %v1933 = vmul.f32 %v1892, %v1892
    %v1934 = vadd.f32 %v1918, %v1919
    %v1935 = vadd.f32 %v1934, %v1920
    %v1936 = vadd.f32 %v1935, %v1921
    %v1937 = vadd.f32 %v1936, %v1922
    %v1938 = vadd.f32 %v1937, %v1923
    %v1939 = vadd.f32 %v1938, %v1924
    %v1940 = vadd.f32 %v1939, %v1925
    %v1941 = vadd.f32 %v1940, %v1926
    %v1942 = vadd.f32 %v1941, %v1927
    %v1943 = vadd.f32 %v1942, %v1928
    %v1944 = vadd.f32 %v1943, %v1929
    %v1945 = vadd.f32 %v1944, %v1930
    %v1946 = vadd.f32 %v1945, %v1931
    %v1947 = vadd.f32 %v1946, %v1932
    %v1948 = vadd.f32 %v1947, %v1933
    %v1949 = vrot.slane %v1948, 4
    %v1950 = vadd.f32 %v1948, %v1949
    %v1951 = vrot.slane %v1950, 2
    %v1952 = vadd.f32 %v1950, %v1951
    %v1953 = vrot.slane %v1952, 1
    %v1954 = vadd.f32 %v1952, %v1953
    %v1955 = vmul.f32 %v1917, 0.0078125
    %v1956 = vmul.f32 %v1954, 0.0078125
    %v1957 = vmul.f32 %v1955, %v1955
    %v1958 = vsub.f32 %v1956, %v1957
    %v1959 = vmax.f32 %v1958, 0.0
    %v1960 = vadd.f32 %v1959, 1e-05
    %v1961 = vrsqrt.pop %v1960
    %v1962 = vmul.f32 %v1961, %v1895
    %v1963 = vmul.f32 %v1955, %v1962
    %v1964 = vsub.f32 %v1896, %v1963
    %v1965 = vlaneseq
    %v1966 = vshrl.u32 %v1965, 7
    %v1967 = vsub.s32 0, %v1966
    %v1968 = vrot.slane %v1962, %v1967
    %v1969 = vmul.f32 %v1817, %v1968
    %v1970 = vmul.f32 %v1822, %v1968
    %v1971 = vmul.f32 %v1827, %v1968
    %v1972 = vmul.f32 %v1832, %v1968
    %v1973 = vmul.f32 %v1837, %v1968
    %v1974 = vmul.f32 %v1842, %v1968
    %v1975 = vmul.f32 %v1847, %v1968
    %v1976 = vmul.f32 %v1852, %v1968
    %v1977 = vmul.f32 %v1857, %v1968
    %v1978 = vmul.f32 %v1862, %v1968
    %v1979 = vmul.f32 %v1867, %v1968
    %v1980 = vmul.f32 %v1872, %v1968
    %v1981 = vmul.f32 %v1877, %v1968
    %v1982 = vmul.f32 %v1882, %v1968
    %v1983 = vmul.f32 %v1887, %v1968
    %v1984 = vmul.f32 %v1892, %v1968
    %v1986 = vlaneseq
    %v1987 = vshrl.u32 %v1986, 7
    %v1988 = vsub.s32 0, %v1987
    %v1989 = vrot.slane %v1964, %v1988
    %v1991 = vadd.f32 %v1969, %v1989
    %v1992 = vadd.f32 %v1970, %v1989
    %v1993 = vadd.f32 %v1971, %v1989
    %v1994 = vadd.f32 %v1972, %v1989
    %v1995 = vadd.f32 %v1973, %v1989
    %v1996 = vadd.f32 %v1974, %v1989
    %v1997 = vadd.f32 %v1975, %v1989
    %v1998 = vadd.f32 %v1976, %v1989
    %v1999 = vadd.f32 %v1977, %v1989
    %v2000 = vadd.f32 %v1978, %v1989
    %v2001 = vadd.f32 %v1979, %v1989
    %v2002 = vadd.f32 %v1980, %v1989
    %v2003 = vadd.f32 %v1981, %v1989
    %v2004 = vadd.f32 %v1982, %v1989
    %v2005 = vadd.f32 %v1983, %v1989
    %v2006 = vadd.f32 %v1984, %v1989
    %v2007 = vmul.f32 %v1991, 0.5
    %v2008 = vmul.f32 %v1992, 0.5
    %v2009 = vmul.f32 %v1993, 0.5
    %v2010 = vmul.f32 %v1994, 0.5
    %v2011 = vmul.f32 %v1995, 0.5
    %v2012 = vmul.f32 %v1996, 0.5
    %v2013 = vmul.f32 %v1997, 0.5
    %v2014 = vmul.f32 %v1998, 0.5
    %v2015 = vmul.f32 %v1999, 0.5
    %v2016 = vmul.f32 %v2000, 0.5
    %v2017 = vmul.f32 %v2001, 0.5
    %v2018 = vmul.f32 %v2002, 0.5
    %v2019 = vmul.f32 %v2003, 0.5
    %v2020 = vmul.f32 %v2004, 0.5
    %v2021 = vmul.f32 %v2005, 0.5
    %v2022 = vmul.f32 %v2006, 0.5
    %v2023 = vtanh.pop %v2007
    %v2024 = vtanh.pop %v2008
    %v2025 = vtanh.pop %v2009
    %v2026 = vtanh.pop %v2010
    %v2027 = vtanh.pop %v2011
    %v2028 = vtanh.pop %v2012
    %v2029 = vtanh.pop %v2013
    %v2030 = vtanh.pop %v2014
    %v2031 = vtanh.pop %v2015
    %v2032 = vtanh.pop %v2016
    %v2033 = vtanh.pop %v2017
    %v2034 = vtanh.pop %v2018
    %v2035 = vtanh.pop %v2019
    %v2036 = vtanh.pop %v2020
    %v2037 = vtanh.pop %v2021
    %v2038 = vtanh.pop %v2022
    %v2039 = vmul.f32 %v2023, 0.5
    %v2040 = vmul.f32 %v2024, 0.5
    %v2041 = vmul.f32 %v2025, 0.5
    %v2042 = vmul.f32 %v2026, 0.5
    %v2043 = vmul.f32 %v2027, 0.5
    %v2044 = vmul.f32 %v2028, 0.5
    %v2045 = vmul.f32 %v2029, 0.5
    %v2046 = vmul.f32 %v2030, 0.5
    %v2047 = vmul.f32 %v2031, 0.5
    %v2048 = vmul.f32 %v2032, 0.5
    %v2049 = vmul.f32 %v2033, 0.5
    %v2050 = vmul.f32 %v2034, 0.5
    %v2051 = vmul.f32 %v2035, 0.5
    %v2052 = vmul.f32 %v2036, 0.5
    %v2053 = vmul.f32 %v2037, 0.5
    %v2054 = vmul.f32 %v2038, 0.5
    %v2055 = vadd.f32 %v2039, 0.5
    %v2056 = vadd.f32 %v2040, 0.5
    %v2057 = vadd.f32 %v2041, 0.5
    %v2058 = vadd.f32 %v2042, 0.5
    %v2059 = vadd.f32 %v2043, 0.5
    %v2060 = vadd.f32 %v2044, 0.5
    %v2061 = vadd.f32 %v2045, 0.5
    %v2062 = vadd.f32 %v2046, 0.5
    %v2063 = vadd.f32 %v2047, 0.5
    %v2064 = vadd.f32 %v2048, 0.5
    %v2065 = vadd.f32 %v2049, 0.5
    %v2066 = vadd.f32 %v2050, 0.5
    %v2067 = vadd.f32 %v2051, 0.5
    %v2068 = vadd.f32 %v2052, 0.5
    %v2069 = vadd.f32 %v2053, 0.5
    %v2070 = vadd.f32 %v2054, 0.5
    %v2071 = vld [vmem:[#allocation7] sm:$0xff]
    %v2072 = vld [vmem:[#allocation7 + $0x8] sm:$0xff]
    %v2073 = vld [vmem:[#allocation7 + $0x10] sm:$0xff]
    %v2074 = vld [vmem:[#allocation7 + $0x18] sm:$0xff]
    %v2075 = vld [vmem:[#allocation7 + $0x20] sm:$0xff]
    %v2076 = vld [vmem:[#allocation7 + $0x28] sm:$0xff]
    %v2077 = vld [vmem:[#allocation7 + $0x30] sm:$0xff]
    %v2078 = vld [vmem:[#allocation7 + $0x38] sm:$0xff]
    %v2079 = vld [vmem:[#allocation7 + $0x40] sm:$0xff]
    %v2080 = vld [vmem:[#allocation7 + $0x48] sm:$0xff]
    %v2081 = vld [vmem:[#allocation7 + $0x50] sm:$0xff]
    %v2082 = vld [vmem:[#allocation7 + $0x58] sm:$0xff]
    %v2083 = vld [vmem:[#allocation7 + $0x60] sm:$0xff]
    %v2084 = vld [vmem:[#allocation7 + $0x68] sm:$0xff]
    %v2085 = vld [vmem:[#allocation7 + $0x70] sm:$0xff]
    %v2086 = vld [vmem:[#allocation7 + $0x78] sm:$0xff]
    %v2087 = vld [vmem:[%s7 + $0xc] sm:$0x1]
    %v2089 = vlaneseq
    %v2090 = vshrl.u32 %v2089, 7
    %v2091 = vsub.s32 0, %v2090
    %v2092 = vrot.slane %v2087, %v2091
    %2094 = vmatprep.subr.mxu0 0.0
    %2095 = vmatpush1.msra.mxu0 %v2071
    %2096 = vmatprep.subr.mxu0 0.0
    %2097 = vmatpush1.msra.mxu0 %v2072
    %2098 = vmatprep.subr.mxu0 0.0
    %2099 = vmatpush1.msra.mxu0 %v2073
    %2100 = vmatprep.subr.mxu0 0.0
    %2101 = vmatpush1.msra.mxu0 %v2074
    %2102 = vmatprep.subr.mxu0 0.0
    %2103 = vmatpush1.msra.mxu0 %v2075
    %2104 = vmatprep.subr.mxu0 0.0
    %2105 = vmatpush1.msra.mxu0 %v2076
    %2106 = vmatprep.subr.mxu0 0.0
    %2107 = vmatpush1.msra.mxu0 %v2077
    %2108 = vmatprep.subr.mxu0 0.0
    %2109 = vmatpush1.msra.mxu0 %v2078
    %2110 = vmatprep.subr.mxu0 0.0
    %2111 = vmatpush1.msra.mxu0 %v2079
    %2112 = vmatprep.subr.mxu0 0.0
    %2113 = vmatpush1.msra.mxu0 %v2080
    %2114 = vmatprep.subr.mxu0 0.0
    %2115 = vmatpush1.msra.mxu0 %v2081
    %2116 = vmatprep.subr.mxu0 0.0
    %2117 = vmatpush1.msra.mxu0 %v2082
    %2118 = vmatprep.subr.mxu0 0.0
    %2119 = vmatpush1.msra.mxu0 %v2083
    %2120 = vmatprep.subr.mxu0 0.0
    %2121 = vmatpush1.msra.mxu0 %v2084
    %2122 = vmatprep.subr.mxu0 0.0
    %2123 = vmatpush1.msra.mxu0 %v2085
    %2124 = vmatprep.subr.mxu0 0.0
    %2125 = vmatpush1.msra.mxu0 %v2086
    %2126 = vmatprep.subr.mxu0 0.0
    %2127 = vmatpush1.msra.mxu0 0.0
    %2128 = vmatprep.subr.mxu0 0.0
    %2129 = vmatpush1.msra.mxu0 0.0
    %2130 = vmatprep.subr.mxu0 0.0
    %2131 = vmatpush1.msra.mxu0 0.0
    %2132 = vmatprep.subr.mxu0 0.0
    %2133 = vmatpush1.msra.mxu0 0.0
    %2134 = vmatprep.subr.mxu0 0.0
    %2135 = vmatpush1.msra.mxu0 0.0
    %2136 = vmatprep.subr.mxu0 0.0
    %2137 = vmatpush1.msra.mxu0 0.0
    %2138 = vmatprep.subr.mxu0 0.0
    %2139 = vmatpush1.msra.mxu0 0.0
    %2140 = vmatprep.subr.mxu0 0.0
    %2141 = vmatpush1.msra.mxu0 0.0
    %2142 = vmatprep.subr.mxu0 0.0
    %2143 = vmatpush1.msra.mxu0 0.0
    %2144 = vmatprep.subr.mxu0 0.0
    %2145 = vmatpush1.msra.mxu0 0.0
    %2146 = vmatprep.subr.mxu0 0.0
    %2147 = vmatpush1.msra.mxu0 0.0
    %2148 = vmatprep.subr.mxu0 0.0
    %2149 = vmatpush1.msra.mxu0 0.0
    %2150 = vmatprep.subr.mxu0 0.0
    %2151 = vmatpush1.msra.mxu0 0.0
    %2152 = vmatprep.subr.mxu0 0.0
    %2153 = vmatpush1.msra.mxu0 0.0
    %2154 = vmatprep.subr.mxu0 0.0
    %2155 = vmatpush1.msra.mxu0 0.0
    %2156 = vmatprep.subr.mxu0 0.0
    %2157 = vmatpush1.msra.mxu0 0.0
    %2158 = vmatprep.mubr.f32.mxu0 0.0
    %2159 = vmatmul.mubr.f32.gmra.mrb[0].mxu0 %v2055
    %v2160 = vpop.f32.mrb[0].mxu0
    %v2161 = vadd.f32 %v2092, %v2160
    %v2162 = vpop.f32.mrb[0].mxu0
    %2163 = vmatprep.mubr.f32.mxu0 0.0
    %2164 = vmatmul.mubr.f32.gmra.mrb[0].mxu0 %v2056
    %v2165 = vpop.f32.mrb[0].mxu0
    %v2166 = vadd.f32 %v2092, %v2165
    %v2167 = vpop.f32.mrb[0].mxu0
    %2168 = vmatprep.mubr.f32.mxu0 0.0
    %2169 = vmatmul.mubr.f32.gmra.mrb[0].mxu0 %v2057
    %v2170 = vpop.f32.mrb[0].mxu0
    %v2171 = vadd.f32 %v2092, %v2170
    %v2172 = vpop.f32.mrb[0].mxu0
    %2173 = vmatprep.mubr.f32.mxu0 0.0
    %2174 = vmatmul.mubr.f32.gmra.mrb[0].mxu0 %v2058
    %v2175 = vpop.f32.mrb[0].mxu0
    %v2176 = vadd.f32 %v2092, %v2175
    %v2177 = vpop.f32.mrb[0].mxu0
    %2178 = vmatprep.mubr.f32.mxu0 0.0
    %2179 = vmatmul.mubr.f32.gmra.mrb[0].mxu0 %v2059
    %v2180 = vpop.f32.mrb[0].mxu0
    %v2181 = vadd.f32 %v2092, %v2180
    %v2182 = vpop.f32.mrb[0].mxu0
    %2183 = vmatprep.mubr.f32.mxu0 0.0
    %2184 = vmatmul.mubr.f32.gmra.mrb[0].mxu0 %v2060
    %v2185 = vpop.f32.mrb[0].mxu0
    %v2186 = vadd.f32 %v2092, %v2185
    %v2187 = vpop.f32.mrb[0].mxu0
    %2188 = vmatprep.mubr.f32.mxu0 0.0
    %2189 = vmatmul.mubr.f32.gmra.mrb[0].mxu0 %v2061
    %v2190 = vpop.f32.mrb[0].mxu0
    %v2191 = vadd.f32 %v2092, %v2190
    %v2192 = vpop.f32.mrb[0].mxu0
    %2193 = vmatprep.mubr.f32.mxu0 0.0
    %2194 = vmatmul.mubr.f32.gmra.mrb[0].mxu0 %v2062
    %v2195 = vpop.f32.mrb[0].mxu0
    %v2196 = vadd.f32 %v2092, %v2195
    %v2197 = vpop.f32.mrb[0].mxu0
    %2198 = vmatprep.mubr.f32.mxu0 0.0
    %2199 = vmatmul.mubr.f32.gmra.mrb[0].mxu0 %v2063
    %v2200 = vpop.f32.mrb[0].mxu0
    %v2201 = vadd.f32 %v2092, %v2200
    %v2202 = vpop.f32.mrb[0].mxu0
    %2203 = vmatprep.mubr.f32.mxu0 0.0
    %2204 = vmatmul.mubr.f32.gmra.mrb[0].mxu0 %v2064
    %v2205 = vpop.f32.mrb[0].mxu0
    %v2206 = vadd.f32 %v2092, %v2205
    %v2207 = vpop.f32.mrb[0].mxu0
    %2208 = vmatprep.mubr.f32.mxu0 0.0
    %2209 = vmatmul.mubr.f32.gmra.mrb[0].mxu0 %v2065
    %v2210 = vpop.f32.mrb[0].mxu0
    %v2211 = vadd.f32 %v2092, %v2210
    %v2212 = vpop.f32.mrb[0].mxu0
    %2213 = vmatprep.mubr.f32.mxu0 0.0
    %2214 = vmatmul.mubr.f32.gmra.mrb[0].mxu0 %v2066
    %v2215 = vpop.f32.mrb[0].mxu0
    %v2216 = vadd.f32 %v2092, %v2215
    %v2217 = vpop.f32.mrb[0].mxu0
    %2218 = vmatprep.mubr.f32.mxu0 0.0
    %2219 = vmatmul.mubr.f32.gmra.mrb[0].mxu0 %v2067
    %v2220 = vpop.f32.mrb[0].mxu0
    %v2221 = vadd.f32 %v2092, %v2220
    %v2222 = vpop.f32.mrb[0].mxu0
    %2223 = vmatprep.mubr.f32.mxu0 0.0
    %2224 = vmatmul.mubr.f32.gmra.mrb[0].mxu0 %v2068
    %v2225 = vpop.f32.mrb[0].mxu0
    %v2226 = vadd.f32 %v2092, %v2225
    %v2227 = vpop.f32.mrb[0].mxu0
    %2228 = vmatprep.mubr.f32.mxu0 0.0
    %2229 = vmatmul.mubr.f32.gmra.mrb[0].mxu0 %v2069
    %v2230 = vpop.f32.mrb[0].mxu0
    %v2231 = vadd.f32 %v2092, %v2230
    %v2232 = vpop.f32.mrb[0].mxu0
    %2233 = vmatprep.mubr.f32.mxu0 0.0
    %2234 = vmatmul.mubr.f32.gmra.mrb[0].mxu0 %v2070
    %v2235 = vpop.f32.mrb[0].mxu0
    %v2236 = vadd.f32 %v2092, %v2235
    %v2237 = vpop.f32.mrb[0].mxu0
    %2238 = vdwg.mxu0
    %2239 = vst [vmem:[%s8] sm:$0xff] %v2161
    %2240 = vst [vmem:[%s8 + $0x8] sm:$0xff] %v2166
    %2241 = vst [vmem:[%s8 + $0x10] sm:$0xff] %v2171
    %2242 = vst [vmem:[%s8 + $0x18] sm:$0xff] %v2176
    %2243 = vst [vmem:[%s8 + $0x20] sm:$0xff] %v2181
    %2244 = vst [vmem:[%s8 + $0x28] sm:$0xff] %v2186
    %2245 = vst [vmem:[%s8 + $0x30] sm:$0xff] %v2191
    %2246 = vst [vmem:[%s8 + $0x38] sm:$0xff] %v2196
    %2247 = vst [vmem:[%s8 + $0x40] sm:$0xff] %v2201
    %2248 = vst [vmem:[%s8 + $0x48] sm:$0xff] %v2206
    %2249 = vst [vmem:[%s8 + $0x50] sm:$0xff] %v2211
    %2250 = vst [vmem:[%s8 + $0x58] sm:$0xff] %v2216
    %2251 = vst [vmem:[%s8 + $0x60] sm:$0xff] %v2221
    %2252 = vst [vmem:[%s8 + $0x68] sm:$0xff] %v2226
    %2253 = vst [vmem:[%s8 + $0x70] sm:$0xff] %v2231
    %2254 = vst [vmem:[%s8 + $0x78] sm:$0xff] %v2236
    // Predicated region
    $region50: #{mlp_forward.1} parent=1 // pred_check
      _
    $region51: #{mlp_forward.1} parent=1 // pred_check_branch
      %2256 = sbr.rel (0) target = $region53
    $region52: #{mlp_forward.1} parent=1 // pred_region
      _
    $region53: #{mlp_forward.1} parent=1 // pred_fallthru
      _
    // Predicated region
    $region54: #{mlp_forward.1} parent=1 // pred_check
      _
    $region55: #{mlp_forward.1} parent=1 // pred_check_branch
      %2258 = sbr.rel (0) target = $region57
    $region56: #{mlp_forward.1} parent=1 // pred_region
      _
    $region57: #{mlp_forward.1} parent=1 // pred_fallthru
      _
    %2259 = vsyncpa [#allocation3], 1
    %2260 = vsyncpa [#allocation5], 1
    %2261 = vsyncpa [#allocation8], 1

</llo_original>
